<compile_context>
chip_gen: v6e
topology: v6e:2x2x1
jax: 0.10.0
libtpu: 0.0.40
codegen_flags: <defaults>
</compile_context>

<pallas_src>
import functools

import jax
import jax.numpy as jnp
from jax.experimental import pallas as pl
from jax.experimental.pallas import tpu as pltpu


# ------------------------------ Pallas kernel ------------------------------

def _mlp_maxpool_kernel(x_ref, w1_ref, b1_ref, w2_ref, b2_ref, o_ref,
                        *, tm, n_chunks, ch, cw, h1p, h2p):
    """SharedMLP (2x Conv1x1 w/ folded BN + ReLU) + max over the nsample axis.

    x_ref  : (TM, Sp*Cp)   bf16  one row per sampled point; samples laid out
                                 sample-major (s, c) along lanes (lane dense)
    w1_ref : (CW, CH*H1p)  bf16  layer-1 weight, block-diagonal over the CH
                                 samples of one chunk (CW = CH*Cp = 128)
    b1_ref : (1, CH*H1p)   f32   layer-1 folded bias, tiled CH times
    w2_ref : (H1p, H2p)    bf16  layer-2 weight
    b2_ref : (1, H2p)      f32   layer-2 folded bias
    o_ref  : (TM, H2p)     f32   max-pooled features (lane dense)
    """
    w1 = w1_ref[...]
    w2 = w2_ref[...]
    b1 = b1_ref[...]
    acc = jnp.full((tm, h2p), -jnp.inf, dtype=jnp.float32)
    # Static Python loops (small fixed trip counts) -> fully unrolled; every
    # slice below is 128-lane aligned, so it is a free view.
    for c in range(n_chunks):
        xc = x_ref[:, c * cw:(c + 1) * cw]                          # (TM, CW) bf16
        # Layer 1: thin per-sample contraction expressed as one lane-dense
        # matmul against a block-diagonal weight.
        h1 = jnp.dot(xc, w1, preferred_element_type=jnp.float32)   # (TM, CH*H1p)
        h1 = jnp.maximum(h1 + b1, 0.0).astype(jnp.bfloat16)        # bias1 + ReLU
        for s in range(ch):
            h2 = jnp.dot(h1[:, s * h1p:(s + 1) * h1p], w2,
                         preferred_element_type=jnp.float32)       # (TM, H2p)
            acc = jnp.maximum(acc, h2)                             # running max
    # bias2 + ReLU commute with the max over samples -> applied once per block.
    o_ref[...] = jnp.maximum(acc + b2_ref[...], 0.0)


# --------------------------- tiling / VMEM budget ---------------------------

def _vmem_budget_bytes():
    """(physical VMEM capacity, working-set budget) -- generation aware."""
    try:
        info = pltpu.get_tpu_info()
        cap = int(getattr(info, "vmem_capacity_bytes", 0) or 0)
    except Exception:
        cap = 0
    if cap <= 0:
        cap = 64 * 1024 * 1024          # conservative fallback: v7x per-core VMEM
    # ~1/3 of physical for our accounted working set leaves headroom for
    # Mosaic's internal scratch: 128 MiB parts (v5e/v6e) -> ~42 MiB,
    # 64 MiB parts (v7x) -> ~21 MiB.
    return cap, min(cap // 3, 48 * 1024 * 1024)


def _choose_tm(M, spcp, cw, ch, h1p, h2p, budget):
    """Pick the point tile from the *actual* block shapes (double-buffered
    input/output blocks, resident weights/biases, in-kernel temporaries)."""
    fixed = 2 * (cw * ch * h1p * 2        # w1 block-diag (bf16), x2 buffers
                 + h1p * h2p * 2          # w2 (bf16)
                 + ch * h1p * 4           # b1 tiled (f32)
                 + h2p * 4)               # b2 (f32)
    per_point = (2 * spcp * 2             # bf16 input block, double buffered
                 + 2 * h2p * 4            # f32 output block, double buffered
                 + ch * h1p * (4 + 2)     # layer-1 chunk intermediate (f32 + bf16)
                 + 2 * h2p * 4)           # per-sample h2 + running max (f32)
    tm = 2048
    while tm > 16 and fixed + tm * per_point > budget:
        tm //= 2
    # v7x has 2 TensorCores: keep >= 2 grid steps so the "parallel" axis can
    # shard across them instead of leaving one core idle.
    while tm > 16 and -(-M // tm) < 2:
        tm //= 2
    return tm, fixed + tm * per_point


def shared_mlp_maxpool(x2d, w1bd, b1t, w2k, b2k, *, ch, cw, h1p, h2p):
    """x2d: (M, Sp*Cp) bf16 -> (M, H2p) f32 max-pooled features."""
    M, spcp = x2d.shape
    n_chunks = spcp // cw
    cp = cw // ch
    sp = n_chunks * ch

    cap, budget = _vmem_budget_bytes()
    TM, needed = _choose_tm(M, spcp, cw, ch, h1p, h2p, budget)
    Mp = -(-M // TM) * TM
    if Mp != M:
        x2d = jnp.pad(x2d, ((0, Mp - M), (0, 0)))

    kernel = functools.partial(_mlp_maxpool_kernel, tm=TM, n_chunks=n_chunks,
                               ch=ch, cw=cw, h1p=h1p, h2p=h2p)
    cost = pl.CostEstimate(
        flops=2 * Mp * sp * (cp * h1p + h1p * h2p),
        transcendentals=0,
        bytes_accessed=int(x2d.size * 2 + w1bd.size * 2 + w2k.size * 2
                           + b1t.size * 4 + b2k.size * 4 + Mp * h2p * 4))

    # Explicit scoped-VMEM limit (v5e defaults to 16 MiB, v6e/v7x to 32 MiB).
    vmem_limit = int(min(cap * 3 // 4, max(needed + (8 << 20), 32 << 20)))

    out = pl.pallas_call(
        kernel,
        out_shape=jax.ShapeDtypeStruct((Mp, h2p), jnp.float32),
        grid=(Mp // TM,),
        in_specs=[
            pl.BlockSpec((TM, spcp), lambda i: (i, 0)),
            pl.BlockSpec((cw, ch * h1p), lambda i: (0, 0)),
            pl.BlockSpec((1, ch * h1p), lambda i: (0, 0)),
            pl.BlockSpec((h1p, h2p), lambda i: (0, 0)),
            pl.BlockSpec((1, h2p), lambda i: (0, 0)),
        ],
        out_specs=pl.BlockSpec((TM, h2p), lambda i: (i, 0)),
        compiler_params=pltpu.CompilerParams(
            dimension_semantics=("parallel",),
            vmem_limit_bytes=vmem_limit),
        cost_estimate=cost,
    )(x2d, w1bd, b1t, w2k, b2k)
    return out[:M]


# --------------------------------- JAX glue ---------------------------------

def furthest_point_sample(xyz, npoint):
    """xyz: (B, N, 3) -> (B, npoint) int32, matching the CUDA FPS (start at 0)."""
    B, N, _ = xyz.shape

    def body(i, state):
        inds, dists, farthest = state
        inds = inds.at[:, i].set(farthest)
        centroid = jnp.take_along_axis(xyz, farthest[:, None, None], axis=1)   # (B,1,3)
        d = jnp.sum((xyz - centroid) ** 2, axis=-1)                            # (B,N)
        dists = jnp.minimum(dists, d)
        farthest = jnp.argmax(dists, axis=-1).astype(jnp.int32)
        return inds, dists, farthest

    inds0 = jnp.zeros((B, npoint), jnp.int32)
    dists0 = jnp.full((B, N), 1e10, jnp.float32)
    far0 = jnp.zeros((B,), jnp.int32)
    inds, _, _ = jax.lax.fori_loop(0, npoint, body, (inds0, dists0, far0))
    return inds


def ball_query(radius, nsample, xyz, new_xyz):
    """Matches CUDA ball_query: first nsample neighbors (in index order) within
    radius; missing slots filled with the first neighbor's index (index 0 when
    the ball is empty, matching the zero-initialized CUDA output)."""
    B, S, _ = new_xyz.shape
    N = xyz.shape[1]
    d2 = jnp.sum((new_xyz[:, :, None, :] - xyz[:, None, :, :]) ** 2, axis=-1)  # (B,S,N)
    mask = d2 < radius * radius
    cum = jnp.cumsum(mask.astype(jnp.int32), axis=-1) - 1                      # rank in ball
    first_idx = jnp.argmax(mask, axis=-1).astype(jnp.int32)                    # (B,S)
    ranks = jnp.where(mask, cum, nsample)
    ranks = jnp.minimum(ranks, nsample)                                        # (B,S,N)

    def per_ball(rank_row, first):
        out = jnp.full((nsample + 1,), first, dtype=jnp.int32)
        out = out.at[rank_row].set(jnp.arange(N, dtype=jnp.int32))
        return out[:nsample]

    return jax.vmap(jax.vmap(per_ball))(ranks, first_idx)                      # (B,S,nsample)


def fold_bn(W, gamma, beta, mean, var, eps=1e-5):
    """Conv2d(1x1, bias=False) + BatchNorm2d (eval mode) -> affine W_eff, b_eff."""
    scale = gamma / jnp.sqrt(var + eps)
    return W * scale[:, None], beta - mean * scale


def _round_up(x, m):
    return -(-x // m) * m


def pointnet_sa_module_votes_forward(xyz, features_cn, params,
                                     npoint, radius, nsample,
                                     use_xyz=True, normalize_xyz=False):
    """
    xyz:         (B, N, 3) f32
    features_cn: (B, C, N) f32  (PyTorch channel-first layout)
    Returns: new_xyz (B, npoint, 3), new_features (B, mlp[-1], npoint), inds (B, npoint)
    """
    B, N, _ = xyz.shape

    # 1) furthest point sampling + gather of new centroids
    inds = furthest_point_sample(xyz, npoint)                                  # (B,npoint)
    new_xyz = jnp.take_along_axis(xyz, inds[..., None], axis=1)                # (B,npoint,3)

    # 2) ball query + grouping (QueryAndGroup)
    # TODO(synk): the grouped tensor is still materialized in HBM; fuse the
    # gather into the kernel via PrefetchScalarGridSpec + manual DMA gather.
    idx = ball_query(radius, nsample, xyz, new_xyz)                            # (B,np,ns)
    grouped_xyz = jnp.take_along_axis(xyz[:, None, :, :], idx[..., None], axis=2)   # (B,np,ns,3)
    grouped_xyz = grouped_xyz - new_xyz[:, :, None, :]
    if normalize_xyz:
        grouped_xyz = grouped_xyz / radius
    feats_nc = jnp.transpose(features_cn, (0, 2, 1))                           # (B,N,C)
    grouped_feat = jnp.take_along_axis(feats_nc[:, None, :, :], idx[..., None], axis=2)  # (B,np,ns,C)
    grouped = (jnp.concatenate([grouped_xyz, grouped_feat], axis=-1)
               if use_xyz else grouped_feat)                                   # (B,np,ns,Cin)

    # 3) pad so the flattened (M, Sp*Cp) activation rows are lane dense and the
    #    per-chunk slices in the kernel stay 128-lane aligned.
    Cin = grouped.shape[-1]
    if Cin <= 128:
        Cp = next(c for c in (8, 16, 32, 64, 128) if c >= Cin)
        CH = 128 // Cp                         # samples per 128-lane chunk
    else:
        Cp = _round_up(Cin, 128)
        CH = 1
    CW = CH * Cp
    Sp = _round_up(max(nsample, 1), CH)

    grouped = jnp.pad(grouped, ((0, 0), (0, 0), (0, 0), (0, Cp - Cin)))
    if Sp != nsample:
        # Replicate the first neighbor: only valid for pooling='max' (the max
        # is unchanged); 'avg'/'rbf' would need masking instead.
        rep = jnp.broadcast_to(grouped[:, :, :1, :], (B, npoint, Sp - nsample, Cp))
        grouped = jnp.concatenate([grouped, rep], axis=2)
    # Contiguous (free) reshape: one lane-dense row per sampled point.
    x2d = grouped.reshape(B * npoint, Sp * Cp).astype(jnp.bfloat16)

    H1 = params["w1"].shape[0]
    H2 = params["w2"].shape[0]
    H1p = _round_up(H1, 128)
    H2p = _round_up(H2, 128)

    w1e, b1e = fold_bn(params["w1"], params["g1"], params["be1"], params["m1"], params["v1"])
    w2e, b2e = fold_bn(params["w2"], params["g2"], params["be2"], params["m2"], params["v2"])
    w1p = jnp.pad(w1e.T, ((0, Cp - Cin), (0, H1p - H1)))                       # (Cp, H1p)
    w2p = jnp.pad(w2e.T, ((0, H1p - H1), (0, H2p - H2)))                       # (H1p, H2p)
    # Block-diagonal layer-1 weight over the CH samples of one chunk.
    # TODO(synk): on v6e/v7x the biases could also be folded into the matmuls
    # (ones column / bias row); skipped since the MXU, not the VALU, binds.
    w1bd = jnp.kron(jnp.eye(CH, dtype=w1p.dtype), w1p).astype(jnp.bfloat16)    # (CW, CH*H1p)
    b1t = jnp.tile(jnp.pad(b1e, (0, H1p - H1))[None, :], (1, CH)).astype(jnp.float32)
    w2k = w2p.astype(jnp.bfloat16)
    b2k = jnp.pad(b2e, (0, H2p - H2))[None, :].astype(jnp.float32)

    pooled = shared_mlp_maxpool(x2d, w1bd, b1t, w2k, b2k,
                                ch=CH, cw=CW, h1p=H1p, h2p=H2p)                # (B*np, H2p)
    pooled = pooled[:, :H2]
    # TODO(synk): pooling='avg' / 'rbf', sample_uniformly and ret_unique_cnt
    # branches not implemented (defaults: pooling='max', sample_uniformly=False).

    new_features = jnp.transpose(pooled.reshape(B, npoint, H2), (0, 2, 1))     # (B,H2,np)
    return new_xyz, new_features, inds


# ----------------------------------- main -----------------------------------

if __name__ == "__main__":
    key = jax.random.PRNGKey(0)
    B, N, C = 2, 64, 4
    npoint, nsample, radius = 16, 16, 0.4
    mlp = [C, 32, 64]                       # use_xyz=True -> layer-1 in = C + 3
    H1, H2 = mlp[1], mlp[2]
    Cin = mlp[0] + 3

    k1, k2, k3, k4 = jax.random.split(key, 4)
    xyz = jax.random.uniform(k1, (B, N, 3), jnp.float32)
    features = jax.random.normal(k2, (B, C, N), jnp.float32)

    params = {
        "w1": 0.1 * jax.random.normal(k3, (H1, Cin), jnp.float32),  # Conv2d(Cin,H1,1)
        "g1": jnp.ones((H1,), jnp.float32),
        "be1": jnp.zeros((H1,), jnp.float32),
        "m1": jnp.zeros((H1,), jnp.float32),
        "v1": jnp.ones((H1,), jnp.float32),
        "w2": 0.1 * jax.random.normal(k4, (H2, H1), jnp.float32),   # Conv2d(H1,H2,1)
        "g2": jnp.ones((H2,), jnp.float32),
        "be2": jnp.zeros((H2,), jnp.float32),
        "m2": jnp.zeros((H2,), jnp.float32),
        "v2": jnp.ones((H2,), jnp.float32),
    }

    fwd = jax.jit(lambda x, f: pointnet_sa_module_votes_forward(
        x, f, params, npoint=npoint, radius=radius, nsample=nsample))
    new_xyz, new_features, inds = fwd(xyz, features)
    jax.block_until_ready((new_xyz, new_features, inds))

    assert new_xyz.shape == (B, npoint, 3)
    assert new_features.shape == (B, H2, npoint)
    assert inds.shape == (B, npoint)
    assert bool(jnp.all(jnp.isfinite(new_features)))

    # Loose parity check vs a pure-f32 JAX reference (bf16 MXU drift expected).
    inds_r = furthest_point_sample(xyz, npoint)
    new_xyz_r = jnp.take_along_axis(xyz, inds_r[..., None], axis=1)
    idx_r = ball_query(radius, nsample, xyz, new_xyz_r)
    gx = (jnp.take_along_axis(xyz[:, None, :, :], idx_r[..., None], axis=2)
          - new_xyz_r[:, :, None, :])
    gf = jnp.take_along_axis(jnp.transpose(features, (0, 2, 1))[:, None, :, :],
                             idx_r[..., None], axis=2)
    g = jnp.concatenate([gx, gf], axis=-1)                                     # (B,np,ns,Cin)
    w1e, b1e = fold_bn(params["w1"], params["g1"], params["be1"], params["m1"], params["v1"])
    w2e, b2e = fold_bn(params["w2"], params["g2"], params["be2"], params["m2"], params["v2"])
    h = jnp.maximum(jnp.einsum("bpsc,hc->bpsh", g, w1e) + b1e, 0.0)
    h = jnp.maximum(jnp.einsum("bpsh,oh->bpso", h, w2e) + b2e, 0.0)
    ref = jnp.transpose(jnp.max(h, axis=2), (0, 2, 1))                         # (B,H2,np)
    assert bool(jnp.allclose(new_features, ref, rtol=5e-2, atol=5e-2))
    assert bool(jnp.allclose(new_xyz, new_xyz_r))
    assert bool(jnp.all(inds == inds_r))

    print("KERNEL_OK")
</pallas_src>

<mosaic_0001>
module attributes {stable_mosaic.version = 11 : i64} {
  func.func @_mlp_maxpool_kernel(%arg0: i32, %arg1: memref<16x128xbf16, #tpu.memory_space<vmem>>, %arg2: memref<128x2048xbf16, #tpu.memory_space<vmem>>, %arg3: memref<1x2048xf32, #tpu.memory_space<vmem>>, %arg4: memref<128x128xbf16, #tpu.memory_space<vmem>>, %arg5: memref<1x128xf32, #tpu.memory_space<vmem>>, %arg6: memref<16x128xf32, #tpu.memory_space<vmem>>) attributes {dimension_semantics = [#tpu.dimension_semantics<parallel>], iteration_bounds = array<i64: 2>, scalar_prefetch = 0 : i64, scratch_operands = 0 : i64, tpu.core_type = #tpu.core_type<tc>, window_params = [{transform_indices = @transform_0, window_bounds = array<i64: 16, 128>}, {pipeline_mode = #tpu.pipeline_mode<synchronous>, transform_indices = @transform_1, window_bounds = array<i64: 128, 2048>}, {pipeline_mode = #tpu.pipeline_mode<synchronous>, transform_indices = @transform_2, window_bounds = array<i64: 1, 2048>}, {pipeline_mode = #tpu.pipeline_mode<synchronous>, transform_indices = @transform_3, window_bounds = array<i64: 128, 128>}, {pipeline_mode = #tpu.pipeline_mode<synchronous>, transform_indices = @transform_4, window_bounds = array<i64: 1, 128>}, {transform_indices = @transform_5, window_bounds = array<i64: 16, 128>}]} {
    %c0 = arith.constant 0 : index
    %c0_0 = arith.constant 0 : index
    %0 = vector.load %arg2[%c0, %c0_0] : memref<128x2048xbf16, #tpu.memory_space<vmem>>, vector<128x2048xbf16>
    %c0_1 = arith.constant 0 : index
    %c0_2 = arith.constant 0 : index
    %1 = vector.load %arg4[%c0_1, %c0_2] : memref<128x128xbf16, #tpu.memory_space<vmem>>, vector<128x128xbf16>
    %c0_3 = arith.constant 0 : index
    %c0_4 = arith.constant 0 : index
    %2 = vector.load %arg3[%c0_3, %c0_4] : memref<1x2048xf32, #tpu.memory_space<vmem>>, vector<1x2048xf32>
    %cst = arith.constant 0xFF800000 : f32
    %3 = vector.broadcast %cst : f32 to vector<16x128xf32>
    %c0_5 = arith.constant 0 : index
    %c0_6 = arith.constant 0 : index
    %4 = vector.load %arg1[%c0_5, %c0_6] : memref<16x128xbf16, #tpu.memory_space<vmem>>, vector<16x128xbf16>
    %cst_7 = arith.constant dense<0.000000e+00> : vector<16x2048xf32>
    %5 = tpu.matmul %4, %0, %cst_7 {dimension_numbers = #tpu.dot_dimension_numbers<[1], [0], [0], [1], [0, 0, 1, 1], [], []>} : vector<16x128xbf16>, vector<128x2048xbf16>, vector<16x2048xf32> -> vector<16x2048xf32>
    %6 = vector.broadcast %2 : vector<1x2048xf32> to vector<16x2048xf32>
    %7 = arith.addf %5, %6 : vector<16x2048xf32>
    %cst_8 = arith.constant 0.000000e+00 : f32
    %8 = vector.broadcast %cst_8 : f32 to vector<16x2048xf32>
    %9 = arith.maximumf %7, %8 : vector<16x2048xf32>
    %10 = arith.truncf %9 : vector<16x2048xf32> to vector<16x2048xbf16>
    %11 = vector.extract_strided_slice %10 {offsets = [0, 0], sizes = [16, 128], strides = [1, 1]} : vector<16x2048xbf16> to vector<16x128xbf16>
    %cst_9 = arith.constant dense<0.000000e+00> : vector<16x128xf32>
    %12 = tpu.matmul %11, %1, %cst_9 {dimension_numbers = #tpu.dot_dimension_numbers<[1], [0], [0], [1], [0, 0, 1, 1], [], []>} : vector<16x128xbf16>, vector<128x128xbf16>, vector<16x128xf32> -> vector<16x128xf32>
    %13 = arith.maximumf %3, %12 : vector<16x128xf32>
    %14 = vector.extract_strided_slice %10 {offsets = [0, 128], sizes = [16, 128], strides = [1, 1]} : vector<16x2048xbf16> to vector<16x128xbf16>
    %cst_10 = arith.constant dense<0.000000e+00> : vector<16x128xf32>
    %15 = tpu.matmul %14, %1, %cst_10 {dimension_numbers = #tpu.dot_dimension_numbers<[1], [0], [0], [1], [0, 0, 1, 1], [], []>} : vector<16x128xbf16>, vector<128x128xbf16>, vector<16x128xf32> -> vector<16x128xf32>
    %16 = arith.maximumf %13, %15 : vector<16x128xf32>
    %17 = vector.extract_strided_slice %10 {offsets = [0, 256], sizes = [16, 128], strides = [1, 1]} : vector<16x2048xbf16> to vector<16x128xbf16>
    %cst_11 = arith.constant dense<0.000000e+00> : vector<16x128xf32>
    %18 = tpu.matmul %17, %1, %cst_11 {dimension_numbers = #tpu.dot_dimension_numbers<[1], [0], [0], [1], [0, 0, 1, 1], [], []>} : vector<16x128xbf16>, vector<128x128xbf16>, vector<16x128xf32> -> vector<16x128xf32>
    %19 = arith.maximumf %16, %18 : vector<16x128xf32>
    %20 = vector.extract_strided_slice %10 {offsets = [0, 384], sizes = [16, 128], strides = [1, 1]} : vector<16x2048xbf16> to vector<16x128xbf16>
    %cst_12 = arith.constant dense<0.000000e+00> : vector<16x128xf32>
    %21 = tpu.matmul %20, %1, %cst_12 {dimension_numbers = #tpu.dot_dimension_numbers<[1], [0], [0], [1], [0, 0, 1, 1], [], []>} : vector<16x128xbf16>, vector<128x128xbf16>, vector<16x128xf32> -> vector<16x128xf32>
    %22 = arith.maximumf %19, %21 : vector<16x128xf32>
    %23 = vector.extract_strided_slice %10 {offsets = [0, 512], sizes = [16, 128], strides = [1, 1]} : vector<16x2048xbf16> to vector<16x128xbf16>
    %cst_13 = arith.constant dense<0.000000e+00> : vector<16x128xf32>
    %24 = tpu.matmul %23, %1, %cst_13 {dimension_numbers = #tpu.dot_dimension_numbers<[1], [0], [0], [1], [0, 0, 1, 1], [], []>} : vector<16x128xbf16>, vector<128x128xbf16>, vector<16x128xf32> -> vector<16x128xf32>
    %25 = arith.maximumf %22, %24 : vector<16x128xf32>
    %26 = vector.extract_strided_slice %10 {offsets = [0, 640], sizes = [16, 128], strides = [1, 1]} : vector<16x2048xbf16> to vector<16x128xbf16>
    %cst_14 = arith.constant dense<0.000000e+00> : vector<16x128xf32>
    %27 = tpu.matmul %26, %1, %cst_14 {dimension_numbers = #tpu.dot_dimension_numbers<[1], [0], [0], [1], [0, 0, 1, 1], [], []>} : vector<16x128xbf16>, vector<128x128xbf16>, vector<16x128xf32> -> vector<16x128xf32>
    %28 = arith.maximumf %25, %27 : vector<16x128xf32>
    %29 = vector.extract_strided_slice %10 {offsets = [0, 768], sizes = [16, 128], strides = [1, 1]} : vector<16x2048xbf16> to vector<16x128xbf16>
    %cst_15 = arith.constant dense<0.000000e+00> : vector<16x128xf32>
    %30 = tpu.matmul %29, %1, %cst_15 {dimension_numbers = #tpu.dot_dimension_numbers<[1], [0], [0], [1], [0, 0, 1, 1], [], []>} : vector<16x128xbf16>, vector<128x128xbf16>, vector<16x128xf32> -> vector<16x128xf32>
    %31 = arith.maximumf %28, %30 : vector<16x128xf32>
    %32 = vector.extract_strided_slice %10 {offsets = [0, 896], sizes = [16, 128], strides = [1, 1]} : vector<16x2048xbf16> to vector<16x128xbf16>
    %cst_16 = arith.constant dense<0.000000e+00> : vector<16x128xf32>
    %33 = tpu.matmul %32, %1, %cst_16 {dimension_numbers = #tpu.dot_dimension_numbers<[1], [0], [0], [1], [0, 0, 1, 1], [], []>} : vector<16x128xbf16>, vector<128x128xbf16>, vector<16x128xf32> -> vector<16x128xf32>
    %34 = arith.maximumf %31, %33 : vector<16x128xf32>
    %35 = vector.extract_strided_slice %10 {offsets = [0, 1024], sizes = [16, 128], strides = [1, 1]} : vector<16x2048xbf16> to vector<16x128xbf16>
    %cst_17 = arith.constant dense<0.000000e+00> : vector<16x128xf32>
    %36 = tpu.matmul %35, %1, %cst_17 {dimension_numbers = #tpu.dot_dimension_numbers<[1], [0], [0], [1], [0, 0, 1, 1], [], []>} : vector<16x128xbf16>, vector<128x128xbf16>, vector<16x128xf32> -> vector<16x128xf32>
    %37 = arith.maximumf %34, %36 : vector<16x128xf32>
    %38 = vector.extract_strided_slice %10 {offsets = [0, 1152], sizes = [16, 128], strides = [1, 1]} : vector<16x2048xbf16> to vector<16x128xbf16>
    %cst_18 = arith.constant dense<0.000000e+00> : vector<16x128xf32>
    %39 = tpu.matmul %38, %1, %cst_18 {dimension_numbers = #tpu.dot_dimension_numbers<[1], [0], [0], [1], [0, 0, 1, 1], [], []>} : vector<16x128xbf16>, vector<128x128xbf16>, vector<16x128xf32> -> vector<16x128xf32>
    %40 = arith.maximumf %37, %39 : vector<16x128xf32>
    %41 = vector.extract_strided_slice %10 {offsets = [0, 1280], sizes = [16, 128], strides = [1, 1]} : vector<16x2048xbf16> to vector<16x128xbf16>
    %cst_19 = arith.constant dense<0.000000e+00> : vector<16x128xf32>
    %42 = tpu.matmul %41, %1, %cst_19 {dimension_numbers = #tpu.dot_dimension_numbers<[1], [0], [0], [1], [0, 0, 1, 1], [], []>} : vector<16x128xbf16>, vector<128x128xbf16>, vector<16x128xf32> -> vector<16x128xf32>
    %43 = arith.maximumf %40, %42 : vector<16x128xf32>
    %44 = vector.extract_strided_slice %10 {offsets = [0, 1408], sizes = [16, 128], strides = [1, 1]} : vector<16x2048xbf16> to vector<16x128xbf16>
    %cst_20 = arith.constant dense<0.000000e+00> : vector<16x128xf32>
    %45 = tpu.matmul %44, %1, %cst_20 {dimension_numbers = #tpu.dot_dimension_numbers<[1], [0], [0], [1], [0, 0, 1, 1], [], []>} : vector<16x128xbf16>, vector<128x128xbf16>, vector<16x128xf32> -> vector<16x128xf32>
    %46 = arith.maximumf %43, %45 : vector<16x128xf32>
    %47 = vector.extract_strided_slice %10 {offsets = [0, 1536], sizes = [16, 128], strides = [1, 1]} : vector<16x2048xbf16> to vector<16x128xbf16>
    %cst_21 = arith.constant dense<0.000000e+00> : vector<16x128xf32>
    %48 = tpu.matmul %47, %1, %cst_21 {dimension_numbers = #tpu.dot_dimension_numbers<[1], [0], [0], [1], [0, 0, 1, 1], [], []>} : vector<16x128xbf16>, vector<128x128xbf16>, vector<16x128xf32> -> vector<16x128xf32>
    %49 = arith.maximumf %46, %48 : vector<16x128xf32>
    %50 = vector.extract_strided_slice %10 {offsets = [0, 1664], sizes = [16, 128], strides = [1, 1]} : vector<16x2048xbf16> to vector<16x128xbf16>
    %cst_22 = arith.constant dense<0.000000e+00> : vector<16x128xf32>
    %51 = tpu.matmul %50, %1, %cst_22 {dimension_numbers = #tpu.dot_dimension_numbers<[1], [0], [0], [1], [0, 0, 1, 1], [], []>} : vector<16x128xbf16>, vector<128x128xbf16>, vector<16x128xf32> -> vector<16x128xf32>
    %52 = arith.maximumf %49, %51 : vector<16x128xf32>
    %53 = vector.extract_strided_slice %10 {offsets = [0, 1792], sizes = [16, 128], strides = [1, 1]} : vector<16x2048xbf16> to vector<16x128xbf16>
    %cst_23 = arith.constant dense<0.000000e+00> : vector<16x128xf32>
    %54 = tpu.matmul %53, %1, %cst_23 {dimension_numbers = #tpu.dot_dimension_numbers<[1], [0], [0], [1], [0, 0, 1, 1], [], []>} : vector<16x128xbf16>, vector<128x128xbf16>, vector<16x128xf32> -> vector<16x128xf32>
    %55 = arith.maximumf %52, %54 : vector<16x128xf32>
    %56 = vector.extract_strided_slice %10 {offsets = [0, 1920], sizes = [16, 128], strides = [1, 1]} : vector<16x2048xbf16> to vector<16x128xbf16>
    %cst_24 = arith.constant dense<0.000000e+00> : vector<16x128xf32>
    %57 = tpu.matmul %56, %1, %cst_24 {dimension_numbers = #tpu.dot_dimension_numbers<[1], [0], [0], [1], [0, 0, 1, 1], [], []>} : vector<16x128xbf16>, vector<128x128xbf16>, vector<16x128xf32> -> vector<16x128xf32>
    %58 = arith.maximumf %55, %57 : vector<16x128xf32>
    %c0_25 = arith.constant 0 : index
    %c0_26 = arith.constant 0 : index
    %59 = vector.load %arg5[%c0_25, %c0_26] : memref<1x128xf32, #tpu.memory_space<vmem>>, vector<1x128xf32>
    %60 = vector.broadcast %59 : vector<1x128xf32> to vector<16x128xf32>
    %61 = arith.addf %58, %60 : vector<16x128xf32>
    %cst_27 = arith.constant 0.000000e+00 : f32
    %62 = vector.broadcast %cst_27 : f32 to vector<16x128xf32>
    %63 = arith.maximumf %61, %62 : vector<16x128xf32>
    %c0_28 = arith.constant 0 : index
    %c0_29 = arith.constant 0 : index
    %64 = vector.load %arg6[%c0_28, %c0_29] : memref<16x128xf32, #tpu.memory_space<vmem>>, vector<16x128xf32>
    tpu.vector_store %arg6[%c0_28, %c0_29], %63 {strides = array<i32>} : memref<16x128xf32, #tpu.memory_space<vmem>>, vector<16x128xf32>,
    return
  }
  func.func @transform_0(%arg0: i32) -> (i32, i32) {
    %c0_i32 = arith.constant 0 : i32
    %c0_i32_0 = arith.constant 0 : i32
    return %arg0, %c0_i32 : i32, i32
  }
  func.func @transform_1(%arg0: i32) -> (i32, i32) {
    %c0_i32 = arith.constant 0 : i32
    %c0_i32_0 = arith.constant 0 : i32
    %c0_i32_1 = arith.constant 0 : i32
    return %c0_i32, %c0_i32_0 : i32, i32
  }
  func.func @transform_2(%arg0: i32) -> (i32, i32) {
    %c0_i32 = arith.constant 0 : i32
    %c0_i32_0 = arith.constant 0 : i32
    %c0_i32_1 = arith.constant 0 : i32
    return %c0_i32, %c0_i32_0 : i32, i32
  }
  func.func @transform_3(%arg0: i32) -> (i32, i32) {
    %c0_i32 = arith.constant 0 : i32
    %c0_i32_0 = arith.constant 0 : i32
    %c0_i32_1 = arith.constant 0 : i32
    return %c0_i32, %c0_i32_0 : i32, i32
  }
  func.func @transform_4(%arg0: i32) -> (i32, i32) {
    %c0_i32 = arith.constant 0 : i32
    %c0_i32_0 = arith.constant 0 : i32
    %c0_i32_1 = arith.constant 0 : i32
    return %c0_i32, %c0_i32_0 : i32, i32
  }
  func.func @transform_5(%arg0: i32) -> (i32, i32) {
    %c0_i32 = arith.constant 0 : i32
    %c0_i32_0 = arith.constant 0 : i32
    return %arg0, %c0_i32 : i32, i32
  }
}

</mosaic_0001>

<llo_original>
// kernel: custom-call.8
$region0: #{custom-call.8}
  %s0 = inlined_call_operand.vmem [shape: f32[2,64], index: 0, kind: output, shape index: {}]

// kernel: sub.24
$region0: #{sub.24}
  #allocation0 [shape = 's32[1]{0}', space=sflag, size = 0x4, scoped, tag = 'scoped memory for sub.24']
  %s0 = inlined_call_operand.<no memory space> [shape: f32[], index: 0, kind: input, shape index: {}]
  %s1 = inlined_call_operand.vmem [shape: f32[32], index: 1, kind: output, shape index: {}]
  %v2 = vstv %s0
  %3 = vst [vmem:[%s1] sm:$0x1] %v2

// kernel: sub.23
$region0: #{sub.23}
  #allocation0 [shape = 's32[1]{0}', space=sflag, size = 0x4, scoped, tag = 'scoped memory for sub.23']
  %s0 = inlined_call_operand.<no memory space> [shape: f32[], index: 0, kind: input, shape index: {}]
  %s1 = inlined_call_operand.vmem [shape: f32[64], index: 1, kind: output, shape index: {}]
  %v2 = vstv %s0
  %3 = vst [vmem:[%s1] sm:$0x1] %v2

// kernel: _lambda_.1
$region0: #{_lambda_.1}
  #allocation0 [shape = 'u32[]', space=smem, size = 0x4, offset = 0x4, fixed_abs, tag = 'smem constant byte address 0x4 - core index']
  #allocation1 [shape = 'u32[144,128]{1,0:T(1,128)}', space=vmem, size = 0x12000, scoped, tag = 'internal scratch']
  %s0 = inlined_call_operand.vmem [shape: bf16[32,128], index: 0, kind: input, shape index: {}]
  %s1 = inlined_call_operand.vmem [shape: bf16[128,2048], index: 1, kind: input, shape index: {}]
  %s2 = inlined_call_operand.vmem [shape: f32[1,2048], index: 2, kind: input, shape index: {}]
  %s3 = inlined_call_operand.vmem [shape: bf16[128,128], index: 3, kind: input, shape index: {}]
  %s4 = inlined_call_operand.vmem [shape: f32[1,128], index: 4, kind: input, shape index: {}]
  %s5 = inlined_call_operand.hbm [shape: f32[32,128], index: 5, kind: output, shape index: {}]
  %s6 = sld [smem:[#allocation0]]
  $region53: #{_lambda_.1} parent=0
    _
  %s8 = ssub.s32 1, %s6
  %s9 = scalar_select 0, %s8, %s6
  $region1: #{_lambda_.1} parent=0
    #allocation2 [shape = 'u8[16384]{0}', space=vmem, size = 0x4000, scoped, tag = 'output window, operand 0']
    #allocation3 [shape = 's32[2]{0}', space=sflag, size = 0x8, scoped, tag = 'scoped memory for _lambda_.1']
    %10 = vsyncpa [#allocation3], 0
    %s11 = scalar_lea.sflag [#allocation3], 1
    %12 = vsyncpa %s11, 0
    loop: start=0, step=1, limit=4
    $region2: #{_lambda_.1} parent=1 // loop_pre_header
      _
    $region3: #{_lambda_.1} parent=1 // loop_header
      %s14 = sphi 0, %s18
      %p15 = scmp.ge.s32.totalorder %s14, 4
      %s24 = sphi 0, %s26
      %s27 = sphi 0, %s24
      %s28 = sphi 0, %s27
      %s44 = sphi 0, %s28
      %s48 = sphi 0, %s48
      %s50 = sphi 0, %s48
      %s51 = sphi 0, %s50
      %s65 = sphi 0, %s51
      %s69 = sphi 0, %s69
      %s71 = sphi 0, %s69
      %s72 = sphi 0, %s71
      %s86 = sphi 0, %s72
      %s90 = sphi 0, %s90
      %s92 = sphi 0, %s90
      %s93 = sphi 0, %s92
      %s107 = sphi 0, %s93
      %s111 = sphi 0, %s111
      %s113 = sphi 0, %s111
      %s114 = sphi 0, %s113
      %s128 = sphi 0, %s114
      %s134 = sphi 0, %s136
      %s137 = sphi 0, %s134
      %s138 = sphi 0, %s137
      %s154 = sphi 0, %s138
    $region4: #{_lambda_.1} parent=1 // loop_header_branch
      %17 = sbr.rel (%p15) target = $region8
    $region5: #{_lambda_.1} parent=1 // loop_body
      %s19 = ssub.s32 %s14, 1
      %s20 = ssub.s32 %s14, 2
      %s21 = sadd.s32 %s14, 1
      %s22 = ssub.s32 %s14, %s21
      %p23 = scmp.eq.s32.totalorder %s22, 0
      %s25 = sadd.s32 %s24, 1
      %s26 = scalar_select %p23, %s24, %s25
      %p29 = pneg %p23
      %p30 = scmp.eq.s32.totalorder %s14, 1
      %p31 = por %p29, %p30
      %p32 = scmp.ne.s32.totalorder %s24, %s27
      %p33 = scmp.eq.s32.totalorder %s14, 0
      %p34 = por %p32, %p33
      %p35 = scmp.ne.s32.totalorder %s24, %s27
      %p36 = scmp.eq.s32.totalorder %s19, 1
      %p37 = por %p35, %p36
      %p38 = scmp.ne.s32.totalorder %s27, %s28
      %p39 = scmp.eq.s32.totalorder %s19, 0
      %p40 = por %p38, %p39
      %p41 = scmp.ne.s32.totalorder %s27, %s28
      %p42 = scmp.eq.s32.totalorder %s20, 1
      %p43 = por %p41, %p42
      %p45 = scmp.ne.s32.totalorder %s28, %s44
      %p46 = scmp.eq.s32.totalorder %s20, 0
      %p47 = por %p45, %p46
      %s49 = sadd.s32 %s48, 1
      %p52 = scmp.eq.s32.totalorder %s14, 1
      %p53 = scmp.ne.s32.totalorder %s48, %s50
      %p54 = scmp.eq.s32.totalorder %s14, 0
      %p55 = por %p53, %p54
      %p56 = scmp.ne.s32.totalorder %s48, %s50
      %p57 = scmp.eq.s32.totalorder %s19, 1
      %p58 = por %p56, %p57
      %p59 = scmp.ne.s32.totalorder %s50, %s51
      %p60 = scmp.eq.s32.totalorder %s19, 0
      %p61 = por %p59, %p60
      %p62 = scmp.ne.s32.totalorder %s50, %s51
      %p63 = scmp.eq.s32.totalorder %s20, 1
      %p64 = por %p62, %p63
      %p66 = scmp.ne.s32.totalorder %s51, %s65
      %p67 = scmp.eq.s32.totalorder %s20, 0
      %p68 = por %p66, %p67
      %s70 = sadd.s32 %s69, 1
      %p73 = scmp.eq.s32.totalorder %s14, 1
      %p74 = scmp.ne.s32.totalorder %s69, %s71
      %p75 = scmp.eq.s32.totalorder %s14, 0
      %p76 = por %p74, %p75
      %p77 = scmp.ne.s32.totalorder %s69, %s71
      %p78 = scmp.eq.s32.totalorder %s19, 1
      %p79 = por %p77, %p78
      %p80 = scmp.ne.s32.totalorder %s71, %s72
      %p81 = scmp.eq.s32.totalorder %s19, 0
      %p82 = por %p80, %p81
      %p83 = scmp.ne.s32.totalorder %s71, %s72
      %p84 = scmp.eq.s32.totalorder %s20, 1
      %p85 = por %p83, %p84
      %p87 = scmp.ne.s32.totalorder %s72, %s86
      %p88 = scmp.eq.s32.totalorder %s20, 0
      %p89 = por %p87, %p88
      %s91 = sadd.s32 %s90, 1
      %p94 = scmp.eq.s32.totalorder %s14, 1
      %p95 = scmp.ne.s32.totalorder %s90, %s92
      %p96 = scmp.eq.s32.totalorder %s14, 0
      %p97 = por %p95, %p96
      %p98 = scmp.ne.s32.totalorder %s90, %s92
      %p99 = scmp.eq.s32.totalorder %s19, 1
      %p100 = por %p98, %p99
      %p101 = scmp.ne.s32.totalorder %s92, %s93
      %p102 = scmp.eq.s32.totalorder %s19, 0
      %p103 = por %p101, %p102
      %p104 = scmp.ne.s32.totalorder %s92, %s93
      %p105 = scmp.eq.s32.totalorder %s20, 1
      %p106 = por %p104, %p105
      %p108 = scmp.ne.s32.totalorder %s93, %s107
      %p109 = scmp.eq.s32.totalorder %s20, 0
      %p110 = por %p108, %p109
      %s112 = sadd.s32 %s111, 1
      %p115 = scmp.eq.s32.totalorder %s14, 1
      %p116 = scmp.ne.s32.totalorder %s111, %s113
      %p117 = scmp.eq.s32.totalorder %s14, 0
      %p118 = por %p116, %p117
      %p119 = scmp.ne.s32.totalorder %s111, %s113
      %p120 = scmp.eq.s32.totalorder %s19, 1
      %p121 = por %p119, %p120
      %p122 = scmp.ne.s32.totalorder %s113, %s114
      %p123 = scmp.eq.s32.totalorder %s19, 0
      %p124 = por %p122, %p123
      %p125 = scmp.ne.s32.totalorder %s113, %s114
      %p126 = scmp.eq.s32.totalorder %s20, 1
      %p127 = por %p125, %p126
      %p129 = scmp.ne.s32.totalorder %s114, %s128
      %p130 = scmp.eq.s32.totalorder %s20, 0
      %p131 = por %p129, %p130
      %s132 = ssub.s32 %s14, %s21
      %p133 = scmp.eq.s32.totalorder %s132, 0
      %s135 = sadd.s32 %s134, 1
      %s136 = scalar_select %p133, %s134, %s135
      %p139 = pneg %p133
      %p140 = scmp.eq.s32.totalorder %s14, 1
      %p141 = por %p139, %p140
      %p142 = scmp.ne.s32.totalorder %s134, %s137
      %p143 = scmp.eq.s32.totalorder %s14, 0
      %p144 = por %p142, %p143
      %p145 = scmp.ne.s32.totalorder %s134, %s137
      %p146 = scmp.eq.s32.totalorder %s19, 1
      %p147 = por %p145, %p146
      %p148 = scmp.ne.s32.totalorder %s137, %s138
      %p149 = scmp.eq.s32.totalorder %s19, 0
      %p150 = por %p148, %p149
      %p151 = scmp.ne.s32.totalorder %s137, %s138
      %p152 = scmp.eq.s32.totalorder %s20, 1
      %p153 = por %p151, %p152
      %p155 = scmp.ne.s32.totalorder %s138, %s154
      %p156 = scmp.eq.s32.totalorder %s20, 0
      %p157 = por %p155, %p156
      %p158 = scmp.le.s32.totalorder 1, %s14
      %p159 = scmp.lt.s32.totalorder %s14, 3
      %p160 = pnand %p158, %p159
      %p161 = pneg %p160
      // Predicated region
      $region9: #{_lambda_.1} parent=5 // pred_check
        _
      $region10: #{_lambda_.1} parent=5 // pred_check_branch
        %163 = sbr.rel (%p160) target = $region12
      $region11: #{_lambda_.1} parent=5 // pred_region
        %s164 = ssub.s32 %s14, 1
        // Predicated region
        $region13: #{_lambda_.1} parent=11 // pred_check
          %p165 = pneg %p61
        $region14: #{_lambda_.1} parent=11 // pred_check_branch
          %167 = sbr.rel (%p165) target = $region16
        $region15: #{_lambda_.1} parent=11 // pred_region
          _
        $region16: #{_lambda_.1} parent=11 // pred_fallthru
          _
        // Predicated region
        $region17: #{_lambda_.1} parent=11 // pred_check
          %p168 = pneg %p82
        $region18: #{_lambda_.1} parent=11 // pred_check_branch
          %170 = sbr.rel (%p168) target = $region20
        $region19: #{_lambda_.1} parent=11 // pred_region
          _
        $region20: #{_lambda_.1} parent=11 // pred_fallthru
          _
        // Predicated region
        $region21: #{_lambda_.1} parent=11 // pred_check
          %p171 = pneg %p103
        $region22: #{_lambda_.1} parent=11 // pred_check_branch
          %173 = sbr.rel (%p171) target = $region24
        $region23: #{_lambda_.1} parent=11 // pred_region
          _
        $region24: #{_lambda_.1} parent=11 // pred_fallthru
          _
        // Predicated region
        $region25: #{_lambda_.1} parent=11 // pred_check
          %p174 = pneg %p124
        $region26: #{_lambda_.1} parent=11 // pred_check_branch
          %176 = sbr.rel (%p174) target = $region28
        $region27: #{_lambda_.1} parent=11 // pred_region
          _
        $region28: #{_lambda_.1} parent=11 // pred_fallthru
          _
      $region12: #{_lambda_.1} parent=5 // pred_fallthru
        _
      %p177 = scmp.lt.s32.totalorder %s14, 2
      // Predicated region
      $region29: #{_lambda_.1} parent=5 // pred_check
        %p178 = pneg %p177
      $region30: #{_lambda_.1} parent=5 // pred_check_branch
        %180 = sbr.rel (%p178) target = $region32
      $region31: #{_lambda_.1} parent=5 // pred_region
        // Predicated region
        $region33: #{_lambda_.1} parent=31 // pred_check
          %p181 = pneg %p34
        $region34: #{_lambda_.1} parent=31 // pred_check_branch
          %183 = sbr.rel (%p181) target = $region36
        $region35: #{_lambda_.1} parent=31 // pred_region
          %s184 = smul.u32 2, %s14
          %p185 = scmp.lt.s32.totalorder %s184, 3
          %s186 = scalar_select %p185, %s184, 3
          %s187 = smul.addr %s186, 4
          %s188 = scalar_lea.vmem %s0, %s187
          %s189 = smul.u32 2, %s14
        $region36: #{_lambda_.1} parent=31 // pred_fallthru
          _
      $region32: #{_lambda_.1} parent=5 // pred_fallthru
        _
      %p190 = scmp.le.s32.totalorder 1, %s14
      %p191 = scmp.lt.s32.totalorder %s14, 3
      %p192 = pnand %p190, %p191
      %p193 = pneg %p192
      // Predicated region
      $region37: #{_lambda_.1} parent=5 // pred_check
        _
      $region38: #{_lambda_.1} parent=5 // pred_check_branch
        %195 = sbr.rel (%p192) target = $region40
      $region39: #{_lambda_.1} parent=5 // pred_region
        %s196 = ssub.s32 %s14, 1
        %s197 = smul.u32 2, %s19
        %p198 = scmp.lt.s32.totalorder %s197, 3
        %s199 = scalar_select %p198, %s197, 3
        %s200 = smul.addr %s199, 4
        %s201 = scalar_lea.vmem %s0, %s200
        %p202 = pneg %p40
        %p203 = pneg %p37
        %p204 = pneg %p61
        %p205 = pneg %p58
        %p206 = pneg %p82
        %p207 = pneg %p79
        %p208 = pneg %p103
        %p209 = pneg %p100
        %p210 = pneg %p124
        %p211 = pneg %p121
        %p212 = pneg %p150
        %p213 = pneg %p147
        %s214 = sand.u32 %s137, 1
        %s215 = scalar_lea.sflag [#allocation3], %s214
        %s216 = sand.u32 %s137, 1
        %s217 = smul.addr %s216, 16
        %s218 = scalar_lea.vmem [#allocation2], %s217
        %s219 = smul.u32 2, %s19
        %p220 = scmp.lt.s32.totalorder %s219, 3
        %s221 = scalar_select %p220, %s219, 3
        %s222 = smul.addr %s221, 4
        %s223 = scalar_lea.vmem %s0, %s222
        %s224 = smul.u32 2, %s19
        %s225 = smul.u32 2, %s19
        %v227 = vld [vmem:[%s1] sm:$0xff]
        %v228 = vld [vmem:[%s1 + $0x8] sm:$0xff]
        %v229 = vld [vmem:[%s1 + $0x10] sm:$0xff]
        %v230 = vld [vmem:[%s1 + $0x18] sm:$0xff]
        %v231 = vld [vmem:[%s1 + $0x20] sm:$0xff]
        %v232 = vld [vmem:[%s1 + $0x28] sm:$0xff]
        %v233 = vld [vmem:[%s1 + $0x30] sm:$0xff]
        %v234 = vld [vmem:[%s1 + $0x38] sm:$0xff]
        %v235 = vld [vmem:[%s1 + $0x40] sm:$0xff]
        %v236 = vld [vmem:[%s1 + $0x48] sm:$0xff]
        %v237 = vld [vmem:[%s1 + $0x50] sm:$0xff]
        %v238 = vld [vmem:[%s1 + $0x58] sm:$0xff]
        %v239 = vld [vmem:[%s1 + $0x60] sm:$0xff]
        %v240 = vld [vmem:[%s1 + $0x68] sm:$0xff]
        %v241 = vld [vmem:[%s1 + $0x70] sm:$0xff]
        %v242 = vld [vmem:[%s1 + $0x78] sm:$0xff]
        %v243 = vld [vmem:[%s1 + $0x80] sm:$0xff]
        %v244 = vld [vmem:[%s1 + $0x88] sm:$0xff]
        %v245 = vld [vmem:[%s1 + $0x90] sm:$0xff]
        %v246 = vld [vmem:[%s1 + $0x98] sm:$0xff]
        %v247 = vld [vmem:[%s1 + $0xa0] sm:$0xff]
        %v248 = vld [vmem:[%s1 + $0xa8] sm:$0xff]
        %v249 = vld [vmem:[%s1 + $0xb0] sm:$0xff]
        %v250 = vld [vmem:[%s1 + $0xb8] sm:$0xff]
        %v251 = vld [vmem:[%s1 + $0xc0] sm:$0xff]
        %v252 = vld [vmem:[%s1 + $0xc8] sm:$0xff]
        %v253 = vld [vmem:[%s1 + $0xd0] sm:$0xff]
        %v254 = vld [vmem:[%s1 + $0xd8] sm:$0xff]
        %v255 = vld [vmem:[%s1 + $0xe0] sm:$0xff]
        %v256 = vld [vmem:[%s1 + $0xe8] sm:$0xff]
        %v257 = vld [vmem:[%s1 + $0xf0] sm:$0xff]
        %v258 = vld [vmem:[%s1 + $0xf8] sm:$0xff]
        %v259 = vld [vmem:[%s1 + $0x100] sm:$0xff]
        %v260 = vld [vmem:[%s1 + $0x108] sm:$0xff]
        %v261 = vld [vmem:[%s1 + $0x110] sm:$0xff]
        %v262 = vld [vmem:[%s1 + $0x118] sm:$0xff]
        %v263 = vld [vmem:[%s1 + $0x120] sm:$0xff]
        %v264 = vld [vmem:[%s1 + $0x128] sm:$0xff]
        %v265 = vld [vmem:[%s1 + $0x130] sm:$0xff]
        %v266 = vld [vmem:[%s1 + $0x138] sm:$0xff]
        %v267 = vld [vmem:[%s1 + $0x140] sm:$0xff]
        %v268 = vld [vmem:[%s1 + $0x148] sm:$0xff]
        %v269 = vld [vmem:[%s1 + $0x150] sm:$0xff]
        %v270 = vld [vmem:[%s1 + $0x158] sm:$0xff]
        %v271 = vld [vmem:[%s1 + $0x160] sm:$0xff]
        %v272 = vld [vmem:[%s1 + $0x168] sm:$0xff]
        %v273 = vld [vmem:[%s1 + $0x170] sm:$0xff]
        %v274 = vld [vmem:[%s1 + $0x178] sm:$0xff]
        %v275 = vld [vmem:[%s1 + $0x180] sm:$0xff]
        %v276 = vld [vmem:[%s1 + $0x188] sm:$0xff]
        %v277 = vld [vmem:[%s1 + $0x190] sm:$0xff]
        %v278 = vld [vmem:[%s1 + $0x198] sm:$0xff]
        %v279 = vld [vmem:[%s1 + $0x1a0] sm:$0xff]
        %v280 = vld [vmem:[%s1 + $0x1a8] sm:$0xff]
        %v281 = vld [vmem:[%s1 + $0x1b0] sm:$0xff]
        %v282 = vld [vmem:[%s1 + $0x1b8] sm:$0xff]
        %v283 = vld [vmem:[%s1 + $0x1c0] sm:$0xff]
        %v284 = vld [vmem:[%s1 + $0x1c8] sm:$0xff]
        %v285 = vld [vmem:[%s1 + $0x1d0] sm:$0xff]
        %v286 = vld [vmem:[%s1 + $0x1d8] sm:$0xff]
        %v287 = vld [vmem:[%s1 + $0x1e0] sm:$0xff]
        %v288 = vld [vmem:[%s1 + $0x1e8] sm:$0xff]
        %v289 = vld [vmem:[%s1 + $0x1f0] sm:$0xff]
        %v290 = vld [vmem:[%s1 + $0x1f8] sm:$0xff]
        %v291 = vld [vmem:[%s1 + $0x200] sm:$0xff]
        %v292 = vld [vmem:[%s1 + $0x208] sm:$0xff]
        %v293 = vld [vmem:[%s1 + $0x210] sm:$0xff]
        %v294 = vld [vmem:[%s1 + $0x218] sm:$0xff]
        %v295 = vld [vmem:[%s1 + $0x220] sm:$0xff]
        %v296 = vld [vmem:[%s1 + $0x228] sm:$0xff]
        %v297 = vld [vmem:[%s1 + $0x230] sm:$0xff]
        %v298 = vld [vmem:[%s1 + $0x238] sm:$0xff]
        %v299 = vld [vmem:[%s1 + $0x240] sm:$0xff]
        %v300 = vld [vmem:[%s1 + $0x248] sm:$0xff]
        %v301 = vld [vmem:[%s1 + $0x250] sm:$0xff]
        %v302 = vld [vmem:[%s1 + $0x258] sm:$0xff]
        %v303 = vld [vmem:[%s1 + $0x260] sm:$0xff]
        %v304 = vld [vmem:[%s1 + $0x268] sm:$0xff]
        %v305 = vld [vmem:[%s1 + $0x270] sm:$0xff]
        %v306 = vld [vmem:[%s1 + $0x278] sm:$0xff]
        %v307 = vld [vmem:[%s1 + $0x280] sm:$0xff]
        %v308 = vld [vmem:[%s1 + $0x288] sm:$0xff]
        %v309 = vld [vmem:[%s1 + $0x290] sm:$0xff]
        %v310 = vld [vmem:[%s1 + $0x298] sm:$0xff]
        %v311 = vld [vmem:[%s1 + $0x2a0] sm:$0xff]
        %v312 = vld [vmem:[%s1 + $0x2a8] sm:$0xff]
        %v313 = vld [vmem:[%s1 + $0x2b0] sm:$0xff]
        %v314 = vld [vmem:[%s1 + $0x2b8] sm:$0xff]
        %v315 = vld [vmem:[%s1 + $0x2c0] sm:$0xff]
        %v316 = vld [vmem:[%s1 + $0x2c8] sm:$0xff]
        %v317 = vld [vmem:[%s1 + $0x2d0] sm:$0xff]
        %v318 = vld [vmem:[%s1 + $0x2d8] sm:$0xff]
        %v319 = vld [vmem:[%s1 + $0x2e0] sm:$0xff]
        %v320 = vld [vmem:[%s1 + $0x2e8] sm:$0xff]
        %v321 = vld [vmem:[%s1 + $0x2f0] sm:$0xff]
        %v322 = vld [vmem:[%s1 + $0x2f8] sm:$0xff]
        %v323 = vld [vmem:[%s1 + $0x300] sm:$0xff]
        %v324 = vld [vmem:[%s1 + $0x308] sm:$0xff]
        %v325 = vld [vmem:[%s1 + $0x310] sm:$0xff]
        %v326 = vld [vmem:[%s1 + $0x318] sm:$0xff]
        %v327 = vld [vmem:[%s1 + $0x320] sm:$0xff]
        %v328 = vld [vmem:[%s1 + $0x328] sm:$0xff]
        %v329 = vld [vmem:[%s1 + $0x330] sm:$0xff]
        %v330 = vld [vmem:[%s1 + $0x338] sm:$0xff]
        %v331 = vld [vmem:[%s1 + $0x340] sm:$0xff]
        %v332 = vld [vmem:[%s1 + $0x348] sm:$0xff]
        %v333 = vld [vmem:[%s1 + $0x350] sm:$0xff]
        %v334 = vld [vmem:[%s1 + $0x358] sm:$0xff]
        %v335 = vld [vmem:[%s1 + $0x360] sm:$0xff]
        %v336 = vld [vmem:[%s1 + $0x368] sm:$0xff]
        %v337 = vld [vmem:[%s1 + $0x370] sm:$0xff]
        %v338 = vld [vmem:[%s1 + $0x378] sm:$0xff]
        %v339 = vld [vmem:[%s1 + $0x380] sm:$0xff]
        %v340 = vld [vmem:[%s1 + $0x388] sm:$0xff]
        %v341 = vld [vmem:[%s1 + $0x390] sm:$0xff]
        %v342 = vld [vmem:[%s1 + $0x398] sm:$0xff]
        %v343 = vld [vmem:[%s1 + $0x3a0] sm:$0xff]
        %v344 = vld [vmem:[%s1 + $0x3a8] sm:$0xff]
        %v345 = vld [vmem:[%s1 + $0x3b0] sm:$0xff]
        %v346 = vld [vmem:[%s1 + $0x3b8] sm:$0xff]
        %v347 = vld [vmem:[%s1 + $0x3c0] sm:$0xff]
        %v348 = vld [vmem:[%s1 + $0x3c8] sm:$0xff]
        %v349 = vld [vmem:[%s1 + $0x3d0] sm:$0xff]
        %v350 = vld [vmem:[%s1 + $0x3d8] sm:$0xff]
        %v351 = vld [vmem:[%s1 + $0x3e0] sm:$0xff]
        %v352 = vld [vmem:[%s1 + $0x3e8] sm:$0xff]
        %v353 = vld [vmem:[%s1 + $0x3f0] sm:$0xff]
        %v354 = vld [vmem:[%s1 + $0x3f8] sm:$0xff]
        %v355 = vld [vmem:[%s3] sm:$0xf]
        %v356 = vld [vmem:[%s3 + $0x4] sm:$0xf]
        %v357 = vld [vmem:[%s3 + $0x8] sm:$0xf]
        %v358 = vld [vmem:[%s3 + $0xc] sm:$0xf]
        %v359 = vld [vmem:[%s3 + $0x10] sm:$0xf]
        %v360 = vld [vmem:[%s3 + $0x14] sm:$0xf]
        %v361 = vld [vmem:[%s3 + $0x18] sm:$0xf]
        %v362 = vld [vmem:[%s3 + $0x1c] sm:$0xf]
        %v363 = vld [vmem:[%s3 + $0x20] sm:$0xf]
        %v364 = vld [vmem:[%s3 + $0x24] sm:$0xf]
        %v365 = vld [vmem:[%s3 + $0x28] sm:$0xf]
        %v366 = vld [vmem:[%s3 + $0x2c] sm:$0xf]
        %v367 = vld [vmem:[%s3 + $0x30] sm:$0xf]
        %v368 = vld [vmem:[%s3 + $0x34] sm:$0xf]
        %v369 = vld [vmem:[%s3 + $0x38] sm:$0xf]
        %v370 = vld [vmem:[%s3 + $0x3c] sm:$0xf]
        %v371 = vld [vmem:[%s2] sm:$0xff]
        %v372 = vld [vmem:[%s2 + $0x8] sm:$0xff]
        %v373 = vld [vmem:[%s223] sm:$0xf]
        %v374 = vld [vmem:[%s223 + $0x4] sm:$0xf]
        %v377 = vlaneseq
        %v378 = vshrl.u32 %v377, 7
        %v379 = vsub.s32 0, %v378
        %v380 = vrot.slane %v371, %v379
        %v381 = vlaneseq
        %v382 = vshrl.u32 %v381, 7
        %v383 = vsub.s32 1, %v382
        %v384 = vrot.slane %v371, %v383
        %v385 = vlaneseq
        %v386 = vshrl.u32 %v385, 7
        %v387 = vsub.s32 2, %v386
        %v388 = vrot.slane %v371, %v387
        %v389 = vlaneseq
        %v390 = vshrl.u32 %v389, 7
        %v391 = vsub.s32 3, %v390
        %v392 = vrot.slane %v371, %v391
        %v393 = vlaneseq
        %v394 = vshrl.u32 %v393, 7
        %v395 = vsub.s32 4, %v394
        %v396 = vrot.slane %v371, %v395
        %v397 = vlaneseq
        %v398 = vshrl.u32 %v397, 7
        %v399 = vsub.s32 5, %v398
        %v400 = vrot.slane %v371, %v399
        %v401 = vlaneseq
        %v402 = vshrl.u32 %v401, 7
        %v403 = vsub.s32 6, %v402
        %v404 = vrot.slane %v371, %v403
        %v405 = vlaneseq
        %v406 = vshrl.u32 %v405, 7
        %v407 = vsub.s32 7, %v406
        %v408 = vrot.slane %v371, %v407
        %v409 = vlaneseq
        %v410 = vshrl.u32 %v409, 7
        %v411 = vsub.s32 0, %v410
        %v412 = vrot.slane %v372, %v411
        %v413 = vlaneseq
        %v414 = vshrl.u32 %v413, 7
        %v415 = vsub.s32 1, %v414
        %v416 = vrot.slane %v372, %v415
        %v417 = vlaneseq
        %v418 = vshrl.u32 %v417, 7
        %v419 = vsub.s32 2, %v418
        %v420 = vrot.slane %v372, %v419
        %v421 = vlaneseq
        %v422 = vshrl.u32 %v421, 7
        %v423 = vsub.s32 3, %v422
        %v424 = vrot.slane %v372, %v423
        %v425 = vlaneseq
        %v426 = vshrl.u32 %v425, 7
        %v427 = vsub.s32 4, %v426
        %v428 = vrot.slane %v372, %v427
        %v429 = vlaneseq
        %v430 = vshrl.u32 %v429, 7
        %v431 = vsub.s32 5, %v430
        %v432 = vrot.slane %v372, %v431
        %v433 = vlaneseq
        %v434 = vshrl.u32 %v433, 7
        %v435 = vsub.s32 6, %v434
        %v436 = vrot.slane %v372, %v435
        %v437 = vlaneseq
        %v438 = vshrl.u32 %v437, 7
        %v439 = vsub.s32 7, %v438
        %v440 = vrot.slane %v372, %v439
        %v459 = vunpack.c.l.b16 %v373
        %v460 = vunpack.c.l.b16 %v374
        %v461 = vpack.c.b16 %v460, %v459
        %v591 = vunpack.c.l.b16 %v227
        %v592 = vunpack.c.h.b16 %v227
        %v593 = vunpack.c.l.b16 %v228
        %v594 = vunpack.c.h.b16 %v228
        %v595 = vunpack.c.l.b16 %v229
        %v596 = vunpack.c.h.b16 %v229
        %v597 = vunpack.c.l.b16 %v230
        %v598 = vunpack.c.h.b16 %v230
        %v599 = vunpack.c.l.b16 %v231
        %v600 = vunpack.c.h.b16 %v231
        %v601 = vunpack.c.l.b16 %v232
        %v602 = vunpack.c.h.b16 %v232
        %v603 = vunpack.c.l.b16 %v233
        %v604 = vunpack.c.h.b16 %v233
        %v605 = vunpack.c.l.b16 %v234
        %v606 = vunpack.c.h.b16 %v234
        %v607 = vunpack.c.l.b16 %v235
        %v608 = vunpack.c.h.b16 %v235
        %v609 = vunpack.c.l.b16 %v236
        %v610 = vunpack.c.h.b16 %v236
        %v611 = vunpack.c.l.b16 %v237
        %v612 = vunpack.c.h.b16 %v237
        %v613 = vunpack.c.l.b16 %v238
        %v614 = vunpack.c.h.b16 %v238
        %v615 = vunpack.c.l.b16 %v239
        %v616 = vunpack.c.h.b16 %v239
        %v617 = vunpack.c.l.b16 %v240
        %v618 = vunpack.c.h.b16 %v240
        %v619 = vunpack.c.l.b16 %v241
        %v620 = vunpack.c.h.b16 %v241
        %v621 = vunpack.c.l.b16 %v242
        %v622 = vunpack.c.h.b16 %v242
        %v623 = vunpack.c.l.b16 %v243
        %v624 = vunpack.c.h.b16 %v243
        %v625 = vunpack.c.l.b16 %v244
        %v626 = vunpack.c.h.b16 %v244
        %v627 = vunpack.c.l.b16 %v245
        %v628 = vunpack.c.h.b16 %v245
        %v629 = vunpack.c.l.b16 %v246
        %v630 = vunpack.c.h.b16 %v246
        %v631 = vunpack.c.l.b16 %v247
        %v632 = vunpack.c.h.b16 %v247
        %v633 = vunpack.c.l.b16 %v248
        %v634 = vunpack.c.h.b16 %v248
        %v635 = vunpack.c.l.b16 %v249
        %v636 = vunpack.c.h.b16 %v249
        %v637 = vunpack.c.l.b16 %v250
        %v638 = vunpack.c.h.b16 %v250
        %v639 = vunpack.c.l.b16 %v251
        %v640 = vunpack.c.h.b16 %v251
        %v641 = vunpack.c.l.b16 %v252
        %v642 = vunpack.c.h.b16 %v252
        %v643 = vunpack.c.l.b16 %v253
        %v644 = vunpack.c.h.b16 %v253
        %v645 = vunpack.c.l.b16 %v254
        %v646 = vunpack.c.h.b16 %v254
        %v647 = vunpack.c.l.b16 %v255
        %v648 = vunpack.c.h.b16 %v255
        %v649 = vunpack.c.l.b16 %v256
        %v650 = vunpack.c.h.b16 %v256
        %v651 = vunpack.c.l.b16 %v257
        %v652 = vunpack.c.h.b16 %v257
        %v653 = vunpack.c.l.b16 %v258
        %v654 = vunpack.c.h.b16 %v258
        %v655 = vunpack.c.l.b16 %v259
        %v656 = vunpack.c.h.b16 %v259
        %v657 = vunpack.c.l.b16 %v260
        %v658 = vunpack.c.h.b16 %v260
        %v659 = vunpack.c.l.b16 %v261
        %v660 = vunpack.c.h.b16 %v261
        %v661 = vunpack.c.l.b16 %v262
        %v662 = vunpack.c.h.b16 %v262
        %v663 = vunpack.c.l.b16 %v263
        %v664 = vunpack.c.h.b16 %v263
        %v665 = vunpack.c.l.b16 %v264
        %v666 = vunpack.c.h.b16 %v264
        %v667 = vunpack.c.l.b16 %v265
        %v668 = vunpack.c.h.b16 %v265
        %v669 = vunpack.c.l.b16 %v266
        %v670 = vunpack.c.h.b16 %v266
        %v671 = vunpack.c.l.b16 %v267
        %v672 = vunpack.c.h.b16 %v267
        %v673 = vunpack.c.l.b16 %v268
        %v674 = vunpack.c.h.b16 %v268
        %v675 = vunpack.c.l.b16 %v269
        %v676 = vunpack.c.h.b16 %v269
        %v677 = vunpack.c.l.b16 %v270
        %v678 = vunpack.c.h.b16 %v270
        %v679 = vunpack.c.l.b16 %v271
        %v680 = vunpack.c.h.b16 %v271
        %v681 = vunpack.c.l.b16 %v272
        %v682 = vunpack.c.h.b16 %v272
        %v683 = vunpack.c.l.b16 %v273
        %v684 = vunpack.c.h.b16 %v273
        %v685 = vunpack.c.l.b16 %v274
        %v686 = vunpack.c.h.b16 %v274
        %v687 = vunpack.c.l.b16 %v275
        %v688 = vunpack.c.h.b16 %v275
        %v689 = vunpack.c.l.b16 %v276
        %v690 = vunpack.c.h.b16 %v276
        %v691 = vunpack.c.l.b16 %v277
        %v692 = vunpack.c.h.b16 %v277
        %v693 = vunpack.c.l.b16 %v278
        %v694 = vunpack.c.h.b16 %v278
        %v695 = vunpack.c.l.b16 %v279
        %v696 = vunpack.c.h.b16 %v279
        %v697 = vunpack.c.l.b16 %v280
        %v698 = vunpack.c.h.b16 %v280
        %v699 = vunpack.c.l.b16 %v281
        %v700 = vunpack.c.h.b16 %v281
        %v701 = vunpack.c.l.b16 %v282
        %v702 = vunpack.c.h.b16 %v282
        %v703 = vunpack.c.l.b16 %v283
        %v704 = vunpack.c.h.b16 %v283
        %v705 = vunpack.c.l.b16 %v284
        %v706 = vunpack.c.h.b16 %v284
        %v707 = vunpack.c.l.b16 %v285
        %v708 = vunpack.c.h.b16 %v285
        %v709 = vunpack.c.l.b16 %v286
        %v710 = vunpack.c.h.b16 %v286
        %v711 = vunpack.c.l.b16 %v287
        %v712 = vunpack.c.h.b16 %v287
        %v713 = vunpack.c.l.b16 %v288
        %v714 = vunpack.c.h.b16 %v288
        %v715 = vunpack.c.l.b16 %v289
        %v716 = vunpack.c.h.b16 %v289
        %v717 = vunpack.c.l.b16 %v290
        %v718 = vunpack.c.h.b16 %v290
        %v719 = vunpack.c.l.b16 %v291
        %v720 = vunpack.c.h.b16 %v291
        %v721 = vunpack.c.l.b16 %v292
        %v722 = vunpack.c.h.b16 %v292
        %v723 = vunpack.c.l.b16 %v293
        %v724 = vunpack.c.h.b16 %v293
        %v725 = vunpack.c.l.b16 %v294
        %v726 = vunpack.c.h.b16 %v294
        %v727 = vunpack.c.l.b16 %v295
        %v728 = vunpack.c.h.b16 %v295
        %v729 = vunpack.c.l.b16 %v296
        %v730 = vunpack.c.h.b16 %v296
        %v731 = vunpack.c.l.b16 %v297
        %v732 = vunpack.c.h.b16 %v297
        %v733 = vunpack.c.l.b16 %v298
        %v734 = vunpack.c.h.b16 %v298
        %v735 = vunpack.c.l.b16 %v299
        %v736 = vunpack.c.h.b16 %v299
        %v737 = vunpack.c.l.b16 %v300
        %v738 = vunpack.c.h.b16 %v300
        %v739 = vunpack.c.l.b16 %v301
        %v740 = vunpack.c.h.b16 %v301
        %v741 = vunpack.c.l.b16 %v302
        %v742 = vunpack.c.h.b16 %v302
        %v743 = vunpack.c.l.b16 %v303
        %v744 = vunpack.c.h.b16 %v303
        %v745 = vunpack.c.l.b16 %v304
        %v746 = vunpack.c.h.b16 %v304
        %v747 = vunpack.c.l.b16 %v305
        %v748 = vunpack.c.h.b16 %v305
        %v749 = vunpack.c.l.b16 %v306
        %v750 = vunpack.c.h.b16 %v306
        %v751 = vunpack.c.l.b16 %v307
        %v752 = vunpack.c.h.b16 %v307
        %v753 = vunpack.c.l.b16 %v308
        %v754 = vunpack.c.h.b16 %v308
        %v755 = vunpack.c.l.b16 %v309
        %v756 = vunpack.c.h.b16 %v309
        %v757 = vunpack.c.l.b16 %v310
        %v758 = vunpack.c.h.b16 %v310
        %v759 = vunpack.c.l.b16 %v311
        %v760 = vunpack.c.h.b16 %v311
        %v761 = vunpack.c.l.b16 %v312
        %v762 = vunpack.c.h.b16 %v312
        %v763 = vunpack.c.l.b16 %v313
        %v764 = vunpack.c.h.b16 %v313
        %v765 = vunpack.c.l.b16 %v314
        %v766 = vunpack.c.h.b16 %v314
        %v767 = vunpack.c.l.b16 %v315
        %v768 = vunpack.c.h.b16 %v315
        %v769 = vunpack.c.l.b16 %v316
        %v770 = vunpack.c.h.b16 %v316
        %v771 = vunpack.c.l.b16 %v317
        %v772 = vunpack.c.h.b16 %v317
        %v773 = vunpack.c.l.b16 %v318
        %v774 = vunpack.c.h.b16 %v318
        %v775 = vunpack.c.l.b16 %v319
        %v776 = vunpack.c.h.b16 %v319
        %v777 = vunpack.c.l.b16 %v320
        %v778 = vunpack.c.h.b16 %v320
        %v779 = vunpack.c.l.b16 %v321
        %v780 = vunpack.c.h.b16 %v321
        %v781 = vunpack.c.l.b16 %v322
        %v782 = vunpack.c.h.b16 %v322
        %v783 = vunpack.c.l.b16 %v323
        %v784 = vunpack.c.h.b16 %v323
        %v785 = vunpack.c.l.b16 %v324
        %v786 = vunpack.c.h.b16 %v324
        %v787 = vunpack.c.l.b16 %v325
        %v788 = vunpack.c.h.b16 %v325
        %v789 = vunpack.c.l.b16 %v326
        %v790 = vunpack.c.h.b16 %v326
        %v791 = vunpack.c.l.b16 %v327
        %v792 = vunpack.c.h.b16 %v327
        %v793 = vunpack.c.l.b16 %v328
        %v794 = vunpack.c.h.b16 %v328
        %v795 = vunpack.c.l.b16 %v329
        %v796 = vunpack.c.h.b16 %v329
        %v797 = vunpack.c.l.b16 %v330
        %v798 = vunpack.c.h.b16 %v330
        %v799 = vunpack.c.l.b16 %v331
        %v800 = vunpack.c.h.b16 %v331
        %v801 = vunpack.c.l.b16 %v332
        %v802 = vunpack.c.h.b16 %v332
        %v803 = vunpack.c.l.b16 %v333
        %v804 = vunpack.c.h.b16 %v333
        %v805 = vunpack.c.l.b16 %v334
        %v806 = vunpack.c.h.b16 %v334
        %v807 = vunpack.c.l.b16 %v335
        %v808 = vunpack.c.h.b16 %v335
        %v809 = vunpack.c.l.b16 %v336
        %v810 = vunpack.c.h.b16 %v336
        %v811 = vunpack.c.l.b16 %v337
        %v812 = vunpack.c.h.b16 %v337
        %v813 = vunpack.c.l.b16 %v338
        %v814 = vunpack.c.h.b16 %v338
        %v815 = vunpack.c.l.b16 %v339
        %v816 = vunpack.c.h.b16 %v339
        %v817 = vunpack.c.l.b16 %v340
        %v818 = vunpack.c.h.b16 %v340
        %v819 = vunpack.c.l.b16 %v341
        %v820 = vunpack.c.h.b16 %v341
        %v821 = vunpack.c.l.b16 %v342
        %v822 = vunpack.c.h.b16 %v342
        %v823 = vunpack.c.l.b16 %v343
        %v824 = vunpack.c.h.b16 %v343
        %v825 = vunpack.c.l.b16 %v344
        %v826 = vunpack.c.h.b16 %v344
        %v827 = vunpack.c.l.b16 %v345
        %v828 = vunpack.c.h.b16 %v345
        %v829 = vunpack.c.l.b16 %v346
        %v830 = vunpack.c.h.b16 %v346
        %v831 = vunpack.c.l.b16 %v347
        %v832 = vunpack.c.h.b16 %v347
        %v833 = vunpack.c.l.b16 %v348
        %v834 = vunpack.c.h.b16 %v348
        %v835 = vunpack.c.l.b16 %v349
        %v836 = vunpack.c.h.b16 %v349
        %v837 = vunpack.c.l.b16 %v350
        %v838 = vunpack.c.h.b16 %v350
        %v839 = vunpack.c.l.b16 %v351
        %v840 = vunpack.c.h.b16 %v351
        %v841 = vunpack.c.l.b16 %v352
        %v842 = vunpack.c.h.b16 %v352
        %v843 = vunpack.c.l.b16 %v353
        %v844 = vunpack.c.h.b16 %v353
        %v845 = vunpack.c.l.b16 %v354
        %v846 = vunpack.c.h.b16 %v354
        %v847 = vpack.c.b16 %v607, %v591
        %v848 = vpack.c.b16 %v608, %v592
        %v849 = vpack.c.b16 %v609, %v593
        %v850 = vpack.c.b16 %v610, %v594
        %v851 = vpack.c.b16 %v611, %v595
        %v852 = vpack.c.b16 %v612, %v596
        %v853 = vpack.c.b16 %v613, %v597
        %v854 = vpack.c.b16 %v614, %v598
        %v855 = vpack.c.b16 %v615, %v599
        %v856 = vpack.c.b16 %v616, %v600
        %v857 = vpack.c.b16 %v617, %v601
        %v858 = vpack.c.b16 %v618, %v602
        %v859 = vpack.c.b16 %v619, %v603
        %v860 = vpack.c.b16 %v620, %v604
        %v861 = vpack.c.b16 %v621, %v605
        %v862 = vpack.c.b16 %v622, %v606
        %v863 = vpack.c.b16 %v639, %v623
        %v864 = vpack.c.b16 %v640, %v624
        %v865 = vpack.c.b16 %v641, %v625
        %v866 = vpack.c.b16 %v642, %v626
        %v867 = vpack.c.b16 %v643, %v627
        %v868 = vpack.c.b16 %v644, %v628
        %v869 = vpack.c.b16 %v645, %v629
        %v870 = vpack.c.b16 %v646, %v630
        %v871 = vpack.c.b16 %v647, %v631
        %v872 = vpack.c.b16 %v648, %v632
        %v873 = vpack.c.b16 %v649, %v633
        %v874 = vpack.c.b16 %v650, %v634
        %v875 = vpack.c.b16 %v651, %v635
        %v876 = vpack.c.b16 %v652, %v636
        %v877 = vpack.c.b16 %v653, %v637
        %v878 = vpack.c.b16 %v654, %v638
        %v879 = vpack.c.b16 %v671, %v655
        %v880 = vpack.c.b16 %v672, %v656
        %v881 = vpack.c.b16 %v673, %v657
        %v882 = vpack.c.b16 %v674, %v658
        %v883 = vpack.c.b16 %v675, %v659
        %v884 = vpack.c.b16 %v676, %v660
        %v885 = vpack.c.b16 %v677, %v661
        %v886 = vpack.c.b16 %v678, %v662
        %v887 = vpack.c.b16 %v679, %v663
        %v888 = vpack.c.b16 %v680, %v664
        %v889 = vpack.c.b16 %v681, %v665
        %v890 = vpack.c.b16 %v682, %v666
        %v891 = vpack.c.b16 %v683, %v667
        %v892 = vpack.c.b16 %v684, %v668
        %v893 = vpack.c.b16 %v685, %v669
        %v894 = vpack.c.b16 %v686, %v670
        %v895 = vpack.c.b16 %v703, %v687
        %v896 = vpack.c.b16 %v704, %v688
        %v897 = vpack.c.b16 %v705, %v689
        %v898 = vpack.c.b16 %v706, %v690
        %v899 = vpack.c.b16 %v707, %v691
        %v900 = vpack.c.b16 %v708, %v692
        %v901 = vpack.c.b16 %v709, %v693
        %v902 = vpack.c.b16 %v710, %v694
        %v903 = vpack.c.b16 %v711, %v695
        %v904 = vpack.c.b16 %v712, %v696
        %v905 = vpack.c.b16 %v713, %v697
        %v906 = vpack.c.b16 %v714, %v698
        %v907 = vpack.c.b16 %v715, %v699
        %v908 = vpack.c.b16 %v716, %v700
        %v909 = vpack.c.b16 %v717, %v701
        %v910 = vpack.c.b16 %v718, %v702
        %v911 = vpack.c.b16 %v735, %v719
        %v912 = vpack.c.b16 %v736, %v720
        %v913 = vpack.c.b16 %v737, %v721
        %v914 = vpack.c.b16 %v738, %v722
        %v915 = vpack.c.b16 %v739, %v723
        %v916 = vpack.c.b16 %v740, %v724
        %v917 = vpack.c.b16 %v741, %v725
        %v918 = vpack.c.b16 %v742, %v726
        %v919 = vpack.c.b16 %v743, %v727
        %v920 = vpack.c.b16 %v744, %v728
        %v921 = vpack.c.b16 %v745, %v729
        %v922 = vpack.c.b16 %v746, %v730
        %v923 = vpack.c.b16 %v747, %v731
        %v924 = vpack.c.b16 %v748, %v732
        %v925 = vpack.c.b16 %v749, %v733
        %v926 = vpack.c.b16 %v750, %v734
        %v927 = vpack.c.b16 %v767, %v751
        %v928 = vpack.c.b16 %v768, %v752
        %v929 = vpack.c.b16 %v769, %v753
        %v930 = vpack.c.b16 %v770, %v754
        %v931 = vpack.c.b16 %v771, %v755
        %v932 = vpack.c.b16 %v772, %v756
        %v933 = vpack.c.b16 %v773, %v757
        %v934 = vpack.c.b16 %v774, %v758
        %v935 = vpack.c.b16 %v775, %v759
        %v936 = vpack.c.b16 %v776, %v760
        %v937 = vpack.c.b16 %v777, %v761
        %v938 = vpack.c.b16 %v778, %v762
        %v939 = vpack.c.b16 %v779, %v763
        %v940 = vpack.c.b16 %v780, %v764
        %v941 = vpack.c.b16 %v781, %v765
        %v942 = vpack.c.b16 %v782, %v766
        %v943 = vpack.c.b16 %v799, %v783
        %v944 = vpack.c.b16 %v800, %v784
        %v945 = vpack.c.b16 %v801, %v785
        %v946 = vpack.c.b16 %v802, %v786
        %v947 = vpack.c.b16 %v803, %v787
        %v948 = vpack.c.b16 %v804, %v788
        %v949 = vpack.c.b16 %v805, %v789
        %v950 = vpack.c.b16 %v806, %v790
        %v951 = vpack.c.b16 %v807, %v791
        %v952 = vpack.c.b16 %v808, %v792
        %v953 = vpack.c.b16 %v809, %v793
        %v954 = vpack.c.b16 %v810, %v794
        %v955 = vpack.c.b16 %v811, %v795
        %v956 = vpack.c.b16 %v812, %v796
        %v957 = vpack.c.b16 %v813, %v797
        %v958 = vpack.c.b16 %v814, %v798
        %v959 = vpack.c.b16 %v831, %v815
        %v960 = vpack.c.b16 %v832, %v816
        %v961 = vpack.c.b16 %v833, %v817
        %v962 = vpack.c.b16 %v834, %v818
        %v963 = vpack.c.b16 %v835, %v819
        %v964 = vpack.c.b16 %v836, %v820
        %v965 = vpack.c.b16 %v837, %v821
        %v966 = vpack.c.b16 %v838, %v822
        %v967 = vpack.c.b16 %v839, %v823
        %v968 = vpack.c.b16 %v840, %v824
        %v969 = vpack.c.b16 %v841, %v825
        %v970 = vpack.c.b16 %v842, %v826
        %v971 = vpack.c.b16 %v843, %v827
        %v972 = vpack.c.b16 %v844, %v828
        %v973 = vpack.c.b16 %v845, %v829
        %v974 = vpack.c.b16 %v846, %v830
        %1103 = vmatprep.subr.bf16.mxu0 %v960
        %1104 = vmatpush1.bf16.msra.mxu0 %v959
        %1105 = vmatprep.subr.bf16.mxu0 %v944
        %1106 = vmatpush1.bf16.msra.mxu0 %v943
        %1107 = vmatprep.subr.bf16.mxu0 %v928
        %1108 = vmatpush1.bf16.msra.mxu0 %v927
        %1109 = vmatprep.subr.bf16.mxu0 %v912
        %1110 = vmatpush1.bf16.msra.mxu0 %v911
        %1111 = vmatprep.subr.bf16.mxu0 %v896
        %1112 = vmatpush1.bf16.msra.mxu0 %v895
        %1113 = vmatprep.subr.bf16.mxu0 %v880
        %1114 = vmatpush1.bf16.msra.mxu0 %v879
        %1115 = vmatprep.subr.bf16.mxu0 %v864
        %1116 = vmatpush1.bf16.msra.mxu0 %v863
        %1117 = vmatprep.subr.bf16.mxu0 %v848
        %1118 = vmatpush1.bf16.msra.mxu0 %v847
        %1119 = vmatprep.subr.bf16.mxu0 0
        %1120 = vmatpush2.bf16.msra.mxu0 0
        %1121 = vmatprep.subr.bf16.mxu0 0
        %1122 = vmatpush2.bf16.msra.mxu0 0
        %1123 = vmatprep.subr.bf16.mxu0 0
        %1124 = vmatpush2.bf16.msra.mxu0 0
        %1125 = vmatprep.subr.bf16.mxu0 0
        %1126 = vmatpush2.bf16.msra.mxu0 0
        %1127 = vmatprep.subr.bf16.mxu0 0
        %1128 = vmatpush2.bf16.msra.mxu0 0
        %1129 = vmatprep.subr.bf16.mxu0 0
        %1130 = vmatpush2.bf16.msra.mxu0 0
        %1131 = vmatprep.subr.bf16.mxu0 0
        %1132 = vmatpush2.bf16.msra.mxu0 0
        %1133 = vmatprep.subr.bf16.mxu0 0
        %1134 = vmatpush2.bf16.msra.mxu0 0
        %1135 = vmatprep.mubr.bf16.mxu0 0
        %1136 = vmatmul.mubr.bf16.gmra.mxu0 %v461
        %v1137 = vpop.f32.mrf.mxu0
        %v1138 = vadd.f32 %v380, %v1137
        %v1139 = vpop.f32.mrf.mxu0
        %v1140 = vadd.f32 %v384, %v1139
        %v1141 = vpop.f32.mrf.mxu0
        %v1142 = vadd.f32 %v380, %v1141
        %v1143 = vpop.f32.mrf.mxu0
        %v1144 = vadd.f32 %v384, %v1143
        %1145 = vdwg.mxu0
        %1146 = vmatprep.subr.bf16.mxu0 %v962
        %1147 = vmatpush1.bf16.msra.mxu0 %v961
        %1148 = vmatprep.subr.bf16.mxu0 %v946
        %1149 = vmatpush1.bf16.msra.mxu0 %v945
        %1150 = vmatprep.subr.bf16.mxu0 %v930
        %1151 = vmatpush1.bf16.msra.mxu0 %v929
        %1152 = vmatprep.subr.bf16.mxu0 %v914
        %1153 = vmatpush1.bf16.msra.mxu0 %v913
        %1154 = vmatprep.subr.bf16.mxu0 %v898
        %1155 = vmatpush1.bf16.msra.mxu0 %v897
        %1156 = vmatprep.subr.bf16.mxu0 %v882
        %1157 = vmatpush1.bf16.msra.mxu0 %v881
        %1158 = vmatprep.subr.bf16.mxu0 %v866
        %1159 = vmatpush1.bf16.msra.mxu0 %v865
        %1160 = vmatprep.subr.bf16.mxu0 %v850
        %1161 = vmatpush1.bf16.msra.mxu0 %v849
        %1162 = vmatprep.subr.bf16.mxu0 0
        %1163 = vmatpush2.bf16.msra.mxu0 0
        %1164 = vmatprep.subr.bf16.mxu0 0
        %1165 = vmatpush2.bf16.msra.mxu0 0
        %1166 = vmatprep.subr.bf16.mxu0 0
        %1167 = vmatpush2.bf16.msra.mxu0 0
        %1168 = vmatprep.subr.bf16.mxu0 0
        %1169 = vmatpush2.bf16.msra.mxu0 0
        %1170 = vmatprep.subr.bf16.mxu0 0
        %1171 = vmatpush2.bf16.msra.mxu0 0
        %1172 = vmatprep.subr.bf16.mxu0 0
        %1173 = vmatpush2.bf16.msra.mxu0 0
        %1174 = vmatprep.subr.bf16.mxu0 0
        %1175 = vmatpush2.bf16.msra.mxu0 0
        %1176 = vmatprep.subr.bf16.mxu0 0
        %1177 = vmatpush2.bf16.msra.mxu0 0
        %1178 = vmatprep.mubr.bf16.mxu0 0
        %1179 = vmatmul.mubr.bf16.gmra.mxu0 %v461
        %v1180 = vpop.f32.mrf.mxu0
        %v1181 = vadd.f32 %v388, %v1180
        %v1182 = vpop.f32.mrf.mxu0
        %v1183 = vadd.f32 %v392, %v1182
        %v1184 = vpop.f32.mrf.mxu0
        %v1185 = vadd.f32 %v388, %v1184
        %v1186 = vpop.f32.mrf.mxu0
        %v1187 = vadd.f32 %v392, %v1186
        %1188 = vdwg.mxu0
        %1189 = vmatprep.subr.bf16.mxu0 %v964
        %1190 = vmatpush1.bf16.msra.mxu0 %v963
        %1191 = vmatprep.subr.bf16.mxu0 %v948
        %1192 = vmatpush1.bf16.msra.mxu0 %v947
        %1193 = vmatprep.subr.bf16.mxu0 %v932
        %1194 = vmatpush1.bf16.msra.mxu0 %v931
        %1195 = vmatprep.subr.bf16.mxu0 %v916
        %1196 = vmatpush1.bf16.msra.mxu0 %v915
        %1197 = vmatprep.subr.bf16.mxu0 %v900
        %1198 = vmatpush1.bf16.msra.mxu0 %v899
        %1199 = vmatprep.subr.bf16.mxu0 %v884
        %1200 = vmatpush1.bf16.msra.mxu0 %v883
        %1201 = vmatprep.subr.bf16.mxu0 %v868
        %1202 = vmatpush1.bf16.msra.mxu0 %v867
        %1203 = vmatprep.subr.bf16.mxu0 %v852
        %1204 = vmatpush1.bf16.msra.mxu0 %v851
        %1205 = vmatprep.subr.bf16.mxu0 0
        %1206 = vmatpush2.bf16.msra.mxu0 0
        %1207 = vmatprep.subr.bf16.mxu0 0
        %1208 = vmatpush2.bf16.msra.mxu0 0
        %1209 = vmatprep.subr.bf16.mxu0 0
        %1210 = vmatpush2.bf16.msra.mxu0 0
        %1211 = vmatprep.subr.bf16.mxu0 0
        %1212 = vmatpush2.bf16.msra.mxu0 0
        %1213 = vmatprep.subr.bf16.mxu0 0
        %1214 = vmatpush2.bf16.msra.mxu0 0
        %1215 = vmatprep.subr.bf16.mxu0 0
        %1216 = vmatpush2.bf16.msra.mxu0 0
        %1217 = vmatprep.subr.bf16.mxu0 0
        %1218 = vmatpush2.bf16.msra.mxu0 0
        %1219 = vmatprep.subr.bf16.mxu0 0
        %1220 = vmatpush2.bf16.msra.mxu0 0
        %1221 = vmatprep.mubr.bf16.mxu0 0
        %1222 = vmatmul.mubr.bf16.gmra.mxu0 %v461
        %v1223 = vpop.f32.mrf.mxu0
        %v1224 = vadd.f32 %v396, %v1223
        %v1225 = vpop.f32.mrf.mxu0
        %v1226 = vadd.f32 %v400, %v1225
        %v1227 = vpop.f32.mrf.mxu0
        %v1228 = vadd.f32 %v396, %v1227
        %v1229 = vpop.f32.mrf.mxu0
        %v1230 = vadd.f32 %v400, %v1229
        %1231 = vdwg.mxu0
        %1232 = vmatprep.subr.bf16.mxu0 %v966
        %1233 = vmatpush1.bf16.msra.mxu0 %v965
        %1234 = vmatprep.subr.bf16.mxu0 %v950
        %1235 = vmatpush1.bf16.msra.mxu0 %v949
        %1236 = vmatprep.subr.bf16.mxu0 %v934
        %1237 = vmatpush1.bf16.msra.mxu0 %v933
        %1238 = vmatprep.subr.bf16.mxu0 %v918
        %1239 = vmatpush1.bf16.msra.mxu0 %v917
        %1240 = vmatprep.subr.bf16.mxu0 %v902
        %1241 = vmatpush1.bf16.msra.mxu0 %v901
        %1242 = vmatprep.subr.bf16.mxu0 %v886
        %1243 = vmatpush1.bf16.msra.mxu0 %v885
        %1244 = vmatprep.subr.bf16.mxu0 %v870
        %1245 = vmatpush1.bf16.msra.mxu0 %v869
        %1246 = vmatprep.subr.bf16.mxu0 %v854
        %1247 = vmatpush1.bf16.msra.mxu0 %v853
        %1248 = vmatprep.subr.bf16.mxu0 0
        %1249 = vmatpush2.bf16.msra.mxu0 0
        %1250 = vmatprep.subr.bf16.mxu0 0
        %1251 = vmatpush2.bf16.msra.mxu0 0
        %1252 = vmatprep.subr.bf16.mxu0 0
        %1253 = vmatpush2.bf16.msra.mxu0 0
        %1254 = vmatprep.subr.bf16.mxu0 0
        %1255 = vmatpush2.bf16.msra.mxu0 0
        %1256 = vmatprep.subr.bf16.mxu0 0
        %1257 = vmatpush2.bf16.msra.mxu0 0
        %1258 = vmatprep.subr.bf16.mxu0 0
        %1259 = vmatpush2.bf16.msra.mxu0 0
        %1260 = vmatprep.subr.bf16.mxu0 0
        %1261 = vmatpush2.bf16.msra.mxu0 0
        %1262 = vmatprep.subr.bf16.mxu0 0
        %1263 = vmatpush2.bf16.msra.mxu0 0
        %1264 = vmatprep.mubr.bf16.mxu0 0
        %1265 = vmatmul.mubr.bf16.gmra.mxu0 %v461
        %v1266 = vpop.f32.mrf.mxu0
        %v1267 = vadd.f32 %v404, %v1266
        %v1268 = vpop.f32.mrf.mxu0
        %v1269 = vadd.f32 %v408, %v1268
        %v1270 = vpop.f32.mrf.mxu0
        %v1271 = vadd.f32 %v404, %v1270
        %v1272 = vpop.f32.mrf.mxu0
        %v1273 = vadd.f32 %v408, %v1272
        %1274 = vdwg.mxu0
        %1275 = vmatprep.subr.bf16.mxu0 %v968
        %1276 = vmatpush1.bf16.msra.mxu0 %v967
        %1277 = vmatprep.subr.bf16.mxu0 %v952
        %1278 = vmatpush1.bf16.msra.mxu0 %v951
        %1279 = vmatprep.subr.bf16.mxu0 %v936
        %1280 = vmatpush1.bf16.msra.mxu0 %v935
        %1281 = vmatprep.subr.bf16.mxu0 %v920
        %1282 = vmatpush1.bf16.msra.mxu0 %v919
        %1283 = vmatprep.subr.bf16.mxu0 %v904
        %1284 = vmatpush1.bf16.msra.mxu0 %v903
        %1285 = vmatprep.subr.bf16.mxu0 %v888
        %1286 = vmatpush1.bf16.msra.mxu0 %v887
        %1287 = vmatprep.subr.bf16.mxu0 %v872
        %1288 = vmatpush1.bf16.msra.mxu0 %v871
        %1289 = vmatprep.subr.bf16.mxu0 %v856
        %1290 = vmatpush1.bf16.msra.mxu0 %v855
        %1291 = vmatprep.subr.bf16.mxu0 0
        %1292 = vmatpush2.bf16.msra.mxu0 0
        %1293 = vmatprep.subr.bf16.mxu0 0
        %1294 = vmatpush2.bf16.msra.mxu0 0
        %1295 = vmatprep.subr.bf16.mxu0 0
        %1296 = vmatpush2.bf16.msra.mxu0 0
        %1297 = vmatprep.subr.bf16.mxu0 0
        %1298 = vmatpush2.bf16.msra.mxu0 0
        %1299 = vmatprep.subr.bf16.mxu0 0
        %1300 = vmatpush2.bf16.msra.mxu0 0
        %1301 = vmatprep.subr.bf16.mxu0 0
        %1302 = vmatpush2.bf16.msra.mxu0 0
        %1303 = vmatprep.subr.bf16.mxu0 0
        %1304 = vmatpush2.bf16.msra.mxu0 0
        %1305 = vmatprep.subr.bf16.mxu0 0
        %1306 = vmatpush2.bf16.msra.mxu0 0
        %1307 = vmatprep.mubr.bf16.mxu0 0
        %1308 = vmatmul.mubr.bf16.gmra.mxu0 %v461
        %v1309 = vpop.f32.mrf.mxu0
        %v1310 = vadd.f32 %v412, %v1309
        %v1311 = vpop.f32.mrf.mxu0
        %v1312 = vadd.f32 %v416, %v1311
        %v1313 = vpop.f32.mrf.mxu0
        %v1314 = vadd.f32 %v412, %v1313
        %v1315 = vpop.f32.mrf.mxu0
        %v1316 = vadd.f32 %v416, %v1315
        %1317 = vdwg.mxu0
        %1318 = vmatprep.subr.bf16.mxu0 %v970
        %1319 = vmatpush1.bf16.msra.mxu0 %v969
        %1320 = vmatprep.subr.bf16.mxu0 %v954
        %1321 = vmatpush1.bf16.msra.mxu0 %v953
        %1322 = vmatprep.subr.bf16.mxu0 %v938
        %1323 = vmatpush1.bf16.msra.mxu0 %v937
        %1324 = vmatprep.subr.bf16.mxu0 %v922
        %1325 = vmatpush1.bf16.msra.mxu0 %v921
        %1326 = vmatprep.subr.bf16.mxu0 %v906
        %1327 = vmatpush1.bf16.msra.mxu0 %v905
        %1328 = vmatprep.subr.bf16.mxu0 %v890
        %1329 = vmatpush1.bf16.msra.mxu0 %v889
        %1330 = vmatprep.subr.bf16.mxu0 %v874
        %1331 = vmatpush1.bf16.msra.mxu0 %v873
        %1332 = vmatprep.subr.bf16.mxu0 %v858
        %1333 = vmatpush1.bf16.msra.mxu0 %v857
        %1334 = vmatprep.subr.bf16.mxu0 0
        %1335 = vmatpush2.bf16.msra.mxu0 0
        %1336 = vmatprep.subr.bf16.mxu0 0
        %1337 = vmatpush2.bf16.msra.mxu0 0
        %1338 = vmatprep.subr.bf16.mxu0 0
        %1339 = vmatpush2.bf16.msra.mxu0 0
        %1340 = vmatprep.subr.bf16.mxu0 0
        %1341 = vmatpush2.bf16.msra.mxu0 0
        %1342 = vmatprep.subr.bf16.mxu0 0
        %1343 = vmatpush2.bf16.msra.mxu0 0
        %1344 = vmatprep.subr.bf16.mxu0 0
        %1345 = vmatpush2.bf16.msra.mxu0 0
        %1346 = vmatprep.subr.bf16.mxu0 0
        %1347 = vmatpush2.bf16.msra.mxu0 0
        %1348 = vmatprep.subr.bf16.mxu0 0
        %1349 = vmatpush2.bf16.msra.mxu0 0
        %1350 = vmatprep.mubr.bf16.mxu0 0
        %1351 = vmatmul.mubr.bf16.gmra.mxu0 %v461
        %v1352 = vpop.f32.mrf.mxu0
        %v1353 = vadd.f32 %v420, %v1352
        %v1354 = vpop.f32.mrf.mxu0
        %v1355 = vadd.f32 %v424, %v1354
        %v1356 = vpop.f32.mrf.mxu0
        %v1357 = vadd.f32 %v420, %v1356
        %v1358 = vpop.f32.mrf.mxu0
        %v1359 = vadd.f32 %v424, %v1358
        %1360 = vdwg.mxu0
        %1361 = vmatprep.subr.bf16.mxu0 %v972
        %1362 = vmatpush1.bf16.msra.mxu0 %v971
        %1363 = vmatprep.subr.bf16.mxu0 %v956
        %1364 = vmatpush1.bf16.msra.mxu0 %v955
        %1365 = vmatprep.subr.bf16.mxu0 %v940
        %1366 = vmatpush1.bf16.msra.mxu0 %v939
        %1367 = vmatprep.subr.bf16.mxu0 %v924
        %1368 = vmatpush1.bf16.msra.mxu0 %v923
        %1369 = vmatprep.subr.bf16.mxu0 %v908
        %1370 = vmatpush1.bf16.msra.mxu0 %v907
        %1371 = vmatprep.subr.bf16.mxu0 %v892
        %1372 = vmatpush1.bf16.msra.mxu0 %v891
        %1373 = vmatprep.subr.bf16.mxu0 %v876
        %1374 = vmatpush1.bf16.msra.mxu0 %v875
        %1375 = vmatprep.subr.bf16.mxu0 %v860
        %1376 = vmatpush1.bf16.msra.mxu0 %v859
        %1377 = vmatprep.subr.bf16.mxu0 0
        %1378 = vmatpush2.bf16.msra.mxu0 0
        %1379 = vmatprep.subr.bf16.mxu0 0
        %1380 = vmatpush2.bf16.msra.mxu0 0
        %1381 = vmatprep.subr.bf16.mxu0 0
        %1382 = vmatpush2.bf16.msra.mxu0 0
        %1383 = vmatprep.subr.bf16.mxu0 0
        %1384 = vmatpush2.bf16.msra.mxu0 0
        %1385 = vmatprep.subr.bf16.mxu0 0
        %1386 = vmatpush2.bf16.msra.mxu0 0
        %1387 = vmatprep.subr.bf16.mxu0 0
        %1388 = vmatpush2.bf16.msra.mxu0 0
        %1389 = vmatprep.subr.bf16.mxu0 0
        %1390 = vmatpush2.bf16.msra.mxu0 0
        %1391 = vmatprep.subr.bf16.mxu0 0
        %1392 = vmatpush2.bf16.msra.mxu0 0
        %1393 = vmatprep.mubr.bf16.mxu0 0
        %1394 = vmatmul.mubr.bf16.gmra.mxu0 %v461
        %v1395 = vpop.f32.mrf.mxu0
        %v1396 = vadd.f32 %v428, %v1395
        %v1397 = vpop.f32.mrf.mxu0
        %v1398 = vadd.f32 %v432, %v1397
        %v1399 = vpop.f32.mrf.mxu0
        %v1400 = vadd.f32 %v428, %v1399
        %v1401 = vpop.f32.mrf.mxu0
        %v1402 = vadd.f32 %v432, %v1401
        %1403 = vdwg.mxu0
        %1404 = vmatprep.subr.bf16.mxu0 %v974
        %1405 = vmatpush1.bf16.msra.mxu0 %v973
        %1406 = vmatprep.subr.bf16.mxu0 %v958
        %1407 = vmatpush1.bf16.msra.mxu0 %v957
        %1408 = vmatprep.subr.bf16.mxu0 %v942
        %1409 = vmatpush1.bf16.msra.mxu0 %v941
        %1410 = vmatprep.subr.bf16.mxu0 %v926
        %1411 = vmatpush1.bf16.msra.mxu0 %v925
        %1412 = vmatprep.subr.bf16.mxu0 %v910
        %1413 = vmatpush1.bf16.msra.mxu0 %v909
        %1414 = vmatprep.subr.bf16.mxu0 %v894
        %1415 = vmatpush1.bf16.msra.mxu0 %v893
        %1416 = vmatprep.subr.bf16.mxu0 %v878
        %1417 = vmatpush1.bf16.msra.mxu0 %v877
        %1418 = vmatprep.subr.bf16.mxu0 %v862
        %1419 = vmatpush1.bf16.msra.mxu0 %v861
        %1420 = vmatprep.subr.bf16.mxu0 0
        %1421 = vmatpush2.bf16.msra.mxu0 0
        %1422 = vmatprep.subr.bf16.mxu0 0
        %1423 = vmatpush2.bf16.msra.mxu0 0
        %1424 = vmatprep.subr.bf16.mxu0 0
        %1425 = vmatpush2.bf16.msra.mxu0 0
        %1426 = vmatprep.subr.bf16.mxu0 0
        %1427 = vmatpush2.bf16.msra.mxu0 0
        %1428 = vmatprep.subr.bf16.mxu0 0
        %1429 = vmatpush2.bf16.msra.mxu0 0
        %1430 = vmatprep.subr.bf16.mxu0 0
        %1431 = vmatpush2.bf16.msra.mxu0 0
        %1432 = vmatprep.subr.bf16.mxu0 0
        %1433 = vmatpush2.bf16.msra.mxu0 0
        %1434 = vmatprep.subr.bf16.mxu0 0
        %1435 = vmatpush2.bf16.msra.mxu0 0
        %1436 = vmatprep.mubr.bf16.mxu0 0
        %1437 = vmatmul.mubr.bf16.gmra.mxu0 %v461
        %v1438 = vpop.f32.mrf.mxu0
        %v1439 = vadd.f32 %v436, %v1438
        %v1440 = vpop.f32.mrf.mxu0
        %v1441 = vadd.f32 %v440, %v1440
        %v1442 = vpop.f32.mrf.mxu0
        %v1443 = vadd.f32 %v436, %v1442
        %v1444 = vpop.f32.mrf.mxu0
        %v1445 = vadd.f32 %v440, %v1444
        %1446 = vdwg.mxu0
        %v1447 = vmax.f32 %v1138, 0.0
        %v1448 = vmax.f32 %v1140, 0.0
        %v1449 = vmax.f32 %v1181, 0.0
        %v1450 = vmax.f32 %v1183, 0.0
        %v1451 = vmax.f32 %v1224, 0.0
        %v1452 = vmax.f32 %v1226, 0.0
        %v1453 = vmax.f32 %v1267, 0.0
        %v1454 = vmax.f32 %v1269, 0.0
        %v1455 = vmax.f32 %v1310, 0.0
        %v1456 = vmax.f32 %v1312, 0.0
        %v1457 = vmax.f32 %v1353, 0.0
        %v1458 = vmax.f32 %v1355, 0.0
        %v1459 = vmax.f32 %v1396, 0.0
        %v1460 = vmax.f32 %v1398, 0.0
        %v1461 = vmax.f32 %v1439, 0.0
        %v1462 = vmax.f32 %v1441, 0.0
        %v1463 = vmax.f32 %v1142, 0.0
        %v1464 = vmax.f32 %v1144, 0.0
        %v1465 = vmax.f32 %v1185, 0.0
        %v1466 = vmax.f32 %v1187, 0.0
        %v1467 = vmax.f32 %v1228, 0.0
        %v1468 = vmax.f32 %v1230, 0.0
        %v1469 = vmax.f32 %v1271, 0.0
        %v1470 = vmax.f32 %v1273, 0.0
        %v1471 = vmax.f32 %v1314, 0.0
        %v1472 = vmax.f32 %v1316, 0.0
        %v1473 = vmax.f32 %v1357, 0.0
        %v1474 = vmax.f32 %v1359, 0.0
        %v1475 = vmax.f32 %v1400, 0.0
        %v1476 = vmax.f32 %v1402, 0.0
        %v1477 = vmax.f32 %v1443, 0.0
        %v1478 = vmax.f32 %v1445, 0.0
        %v1479 = vpack.c.bf16 %v1463, %v1447
        %v1480 = vpack.c.bf16 %v1464, %v1448
        %v1481 = vpack.c.bf16 %v1465, %v1449
        %v1482 = vpack.c.bf16 %v1466, %v1450
        %v1483 = vpack.c.bf16 %v1467, %v1451
        %v1484 = vpack.c.bf16 %v1468, %v1452
        %v1485 = vpack.c.bf16 %v1469, %v1453
        %v1486 = vpack.c.bf16 %v1470, %v1454
        %v1487 = vpack.c.bf16 %v1471, %v1455
        %v1488 = vpack.c.bf16 %v1472, %v1456
        %v1489 = vpack.c.bf16 %v1473, %v1457
        %v1490 = vpack.c.bf16 %v1474, %v1458
        %v1491 = vpack.c.bf16 %v1475, %v1459
        %v1492 = vpack.c.bf16 %v1476, %v1460
        %v1493 = vpack.c.bf16 %v1477, %v1461
        %v1494 = vpack.c.bf16 %v1478, %v1462
        %v1511 = vunpack.c.l.b16 %v355
        %v1512 = vunpack.c.l.b16 %v356
        %v1513 = vunpack.c.l.b16 %v357
        %v1514 = vunpack.c.l.b16 %v358
        %v1515 = vunpack.c.l.b16 %v359
        %v1516 = vunpack.c.l.b16 %v360
        %v1517 = vunpack.c.l.b16 %v361
        %v1518 = vunpack.c.l.b16 %v362
        %v1519 = vunpack.c.l.b16 %v363
        %v1520 = vunpack.c.l.b16 %v364
        %v1521 = vunpack.c.l.b16 %v365
        %v1522 = vunpack.c.l.b16 %v366
        %v1523 = vunpack.c.l.b16 %v367
        %v1524 = vunpack.c.l.b16 %v368
        %v1525 = vunpack.c.l.b16 %v369
        %v1526 = vunpack.c.l.b16 %v370
        %v1527 = vpack.c.b16 %v1512, %v1511
        %v1528 = vpack.c.b16 %v1514, %v1513
        %v1529 = vpack.c.b16 %v1516, %v1515
        %v1530 = vpack.c.b16 %v1518, %v1517
        %v1531 = vpack.c.b16 %v1520, %v1519
        %v1532 = vpack.c.b16 %v1522, %v1521
        %v1533 = vpack.c.b16 %v1524, %v1523
        %v1534 = vpack.c.b16 %v1526, %v1525
        %1543 = vmatprep.subr.bf16.mxu0 0
        %1544 = vmatpush1.bf16.msra.mxu0 %v1534
        %1545 = vmatprep.subr.bf16.mxu0 0
        %1546 = vmatpush1.bf16.msra.mxu0 %v1533
        %1547 = vmatprep.subr.bf16.mxu0 0
        %1548 = vmatpush1.bf16.msra.mxu0 %v1532
        %1549 = vmatprep.subr.bf16.mxu0 0
        %1550 = vmatpush1.bf16.msra.mxu0 %v1531
        %1551 = vmatprep.subr.bf16.mxu0 0
        %1552 = vmatpush1.bf16.msra.mxu0 %v1530
        %1553 = vmatprep.subr.bf16.mxu0 0
        %1554 = vmatpush1.bf16.msra.mxu0 %v1529
        %1555 = vmatprep.subr.bf16.mxu0 0
        %1556 = vmatpush1.bf16.msra.mxu0 %v1528
        %1557 = vmatprep.subr.bf16.mxu0 0
        %1558 = vmatpush1.bf16.msra.mxu0 %v1527
        %1559 = vmatprep.subr.bf16.mxu0 0
        %1560 = vmatpush2.bf16.msra.mxu0 0
        %1561 = vmatprep.subr.bf16.mxu0 0
        %1562 = vmatpush2.bf16.msra.mxu0 0
        %1563 = vmatprep.subr.bf16.mxu0 0
        %1564 = vmatpush2.bf16.msra.mxu0 0
        %1565 = vmatprep.subr.bf16.mxu0 0
        %1566 = vmatpush2.bf16.msra.mxu0 0
        %1567 = vmatprep.subr.bf16.mxu0 0
        %1568 = vmatpush2.bf16.msra.mxu0 0
        %1569 = vmatprep.subr.bf16.mxu0 0
        %1570 = vmatpush2.bf16.msra.mxu0 0
        %1571 = vmatprep.subr.bf16.mxu0 0
        %1572 = vmatpush2.bf16.msra.mxu0 0
        %1573 = vmatprep.subr.bf16.mxu0 0
        %1574 = vmatpush2.bf16.msra.mxu0 0
        %1575 = vmatprep.mubr.bf16.mxu0 0
        %1576 = vmatmul.mubr.bf16.gmra.mxu0 %v1479
        %v1577 = vpop.f32.mrf.mxu0
        %v1578 = vadd.f32 0.0, %v1577
        %v1579 = vpop.f32.mrf.mxu0
        %v1580 = vpop.f32.mrf.mxu0
        %v1581 = vadd.f32 0.0, %v1580
        %v1582 = vpop.f32.mrf.mxu0
        %1583 = vdwg.mxu0
        %1584 = vmatprep.subr.bf16.mxu0 0
        %1585 = vmatpush1.bf16.msra.mxu0 %v1534
        %1586 = vmatprep.subr.bf16.mxu0 0
        %1587 = vmatpush1.bf16.msra.mxu0 %v1533
        %1588 = vmatprep.subr.bf16.mxu0 0
        %1589 = vmatpush1.bf16.msra.mxu0 %v1532
        %1590 = vmatprep.subr.bf16.mxu0 0
        %1591 = vmatpush1.bf16.msra.mxu0 %v1531
        %1592 = vmatprep.subr.bf16.mxu0 0
        %1593 = vmatpush1.bf16.msra.mxu0 %v1530
        %1594 = vmatprep.subr.bf16.mxu0 0
        %1595 = vmatpush1.bf16.msra.mxu0 %v1529
        %1596 = vmatprep.subr.bf16.mxu0 0
        %1597 = vmatpush1.bf16.msra.mxu0 %v1528
        %1598 = vmatprep.subr.bf16.mxu0 0
        %1599 = vmatpush1.bf16.msra.mxu0 %v1527
        %1600 = vmatprep.subr.bf16.mxu0 0
        %1601 = vmatpush2.bf16.msra.mxu0 0
        %1602 = vmatprep.subr.bf16.mxu0 0
        %1603 = vmatpush2.bf16.msra.mxu0 0
        %1604 = vmatprep.subr.bf16.mxu0 0
        %1605 = vmatpush2.bf16.msra.mxu0 0
        %1606 = vmatprep.subr.bf16.mxu0 0
        %1607 = vmatpush2.bf16.msra.mxu0 0
        %1608 = vmatprep.subr.bf16.mxu0 0
        %1609 = vmatpush2.bf16.msra.mxu0 0
        %1610 = vmatprep.subr.bf16.mxu0 0
        %1611 = vmatpush2.bf16.msra.mxu0 0
        %1612 = vmatprep.subr.bf16.mxu0 0
        %1613 = vmatpush2.bf16.msra.mxu0 0
        %1614 = vmatprep.subr.bf16.mxu0 0
        %1615 = vmatpush2.bf16.msra.mxu0 0
        %1616 = vmatprep.mubr.bf16.mxu0 0
        %1617 = vmatmul.mubr.bf16.gmra.mxu0 %v1480
        %v1618 = vpop.f32.mrf.mxu0
        %v1619 = vadd.f32 0.0, %v1618
        %v1620 = vpop.f32.mrf.mxu0
        %v1621 = vpop.f32.mrf.mxu0
        %v1622 = vadd.f32 0.0, %v1621
        %v1623 = vpop.f32.mrf.mxu0
        %1624 = vdwg.mxu0
        %v1625 = vmax.f32 %v1578, %v1619
        %v1626 = vmax.f32 %v1581, %v1622
        %1627 = vmatprep.subr.bf16.mxu0 0
        %1628 = vmatpush1.bf16.msra.mxu0 %v1534
        %1629 = vmatprep.subr.bf16.mxu0 0
        %1630 = vmatpush1.bf16.msra.mxu0 %v1533
        %1631 = vmatprep.subr.bf16.mxu0 0
        %1632 = vmatpush1.bf16.msra.mxu0 %v1532
        %1633 = vmatprep.subr.bf16.mxu0 0
        %1634 = vmatpush1.bf16.msra.mxu0 %v1531
        %1635 = vmatprep.subr.bf16.mxu0 0
        %1636 = vmatpush1.bf16.msra.mxu0 %v1530
        %1637 = vmatprep.subr.bf16.mxu0 0
        %1638 = vmatpush1.bf16.msra.mxu0 %v1529
        %1639 = vmatprep.subr.bf16.mxu0 0
        %1640 = vmatpush1.bf16.msra.mxu0 %v1528
        %1641 = vmatprep.subr.bf16.mxu0 0
        %1642 = vmatpush1.bf16.msra.mxu0 %v1527
        %1643 = vmatprep.subr.bf16.mxu0 0
        %1644 = vmatpush2.bf16.msra.mxu0 0
        %1645 = vmatprep.subr.bf16.mxu0 0
        %1646 = vmatpush2.bf16.msra.mxu0 0
        %1647 = vmatprep.subr.bf16.mxu0 0
        %1648 = vmatpush2.bf16.msra.mxu0 0
        %1649 = vmatprep.subr.bf16.mxu0 0
        %1650 = vmatpush2.bf16.msra.mxu0 0
        %1651 = vmatprep.subr.bf16.mxu0 0
        %1652 = vmatpush2.bf16.msra.mxu0 0
        %1653 = vmatprep.subr.bf16.mxu0 0
        %1654 = vmatpush2.bf16.msra.mxu0 0
        %1655 = vmatprep.subr.bf16.mxu0 0
        %1656 = vmatpush2.bf16.msra.mxu0 0
        %1657 = vmatprep.subr.bf16.mxu0 0
        %1658 = vmatpush2.bf16.msra.mxu0 0
        %1659 = vmatprep.mubr.bf16.mxu0 0
        %1660 = vmatmul.mubr.bf16.gmra.mxu0 %v1481
        %v1661 = vpop.f32.mrf.mxu0
        %v1662 = vadd.f32 0.0, %v1661
        %v1663 = vpop.f32.mrf.mxu0
        %v1664 = vpop.f32.mrf.mxu0
        %v1665 = vadd.f32 0.0, %v1664
        %v1666 = vpop.f32.mrf.mxu0
        %1667 = vdwg.mxu0
        %v1668 = vmax.f32 %v1625, %v1662
        %v1669 = vmax.f32 %v1626, %v1665
        %1670 = vmatprep.subr.bf16.mxu0 0
        %1671 = vmatpush1.bf16.msra.mxu0 %v1534
        %1672 = vmatprep.subr.bf16.mxu0 0
        %1673 = vmatpush1.bf16.msra.mxu0 %v1533
        %1674 = vmatprep.subr.bf16.mxu0 0
        %1675 = vmatpush1.bf16.msra.mxu0 %v1532
        %1676 = vmatprep.subr.bf16.mxu0 0
        %1677 = vmatpush1.bf16.msra.mxu0 %v1531
        %1678 = vmatprep.subr.bf16.mxu0 0
        %1679 = vmatpush1.bf16.msra.mxu0 %v1530
        %1680 = vmatprep.subr.bf16.mxu0 0
        %1681 = vmatpush1.bf16.msra.mxu0 %v1529
        %1682 = vmatprep.subr.bf16.mxu0 0
        %1683 = vmatpush1.bf16.msra.mxu0 %v1528
        %1684 = vmatprep.subr.bf16.mxu0 0
        %1685 = vmatpush1.bf16.msra.mxu0 %v1527
        %1686 = vmatprep.subr.bf16.mxu0 0
        %1687 = vmatpush2.bf16.msra.mxu0 0
        %1688 = vmatprep.subr.bf16.mxu0 0
        %1689 = vmatpush2.bf16.msra.mxu0 0
        %1690 = vmatprep.subr.bf16.mxu0 0
        %1691 = vmatpush2.bf16.msra.mxu0 0
        %1692 = vmatprep.subr.bf16.mxu0 0
        %1693 = vmatpush2.bf16.msra.mxu0 0
        %1694 = vmatprep.subr.bf16.mxu0 0
        %1695 = vmatpush2.bf16.msra.mxu0 0
        %1696 = vmatprep.subr.bf16.mxu0 0
        %1697 = vmatpush2.bf16.msra.mxu0 0
        %1698 = vmatprep.subr.bf16.mxu0 0
        %1699 = vmatpush2.bf16.msra.mxu0 0
        %1700 = vmatprep.subr.bf16.mxu0 0
        %1701 = vmatpush2.bf16.msra.mxu0 0
        %1702 = vmatprep.mubr.bf16.mxu0 0
        %1703 = vmatmul.mubr.bf16.gmra.mxu0 %v1482
        %v1704 = vpop.f32.mrf.mxu0
        %v1705 = vadd.f32 0.0, %v1704
        %v1706 = vpop.f32.mrf.mxu0
        %v1707 = vpop.f32.mrf.mxu0
        %v1708 = vadd.f32 0.0, %v1707
        %v1709 = vpop.f32.mrf.mxu0
        %1710 = vdwg.mxu0
        %v1711 = vmax.f32 %v1668, %v1705
        %v1712 = vmax.f32 %v1669, %v1708
        %1713 = vmatprep.subr.bf16.mxu0 0
        %1714 = vmatpush1.bf16.msra.mxu0 %v1534
        %1715 = vmatprep.subr.bf16.mxu0 0
        %1716 = vmatpush1.bf16.msra.mxu0 %v1533
        %1717 = vmatprep.subr.bf16.mxu0 0
        %1718 = vmatpush1.bf16.msra.mxu0 %v1532
        %1719 = vmatprep.subr.bf16.mxu0 0
        %1720 = vmatpush1.bf16.msra.mxu0 %v1531
        %1721 = vmatprep.subr.bf16.mxu0 0
        %1722 = vmatpush1.bf16.msra.mxu0 %v1530
        %1723 = vmatprep.subr.bf16.mxu0 0
        %1724 = vmatpush1.bf16.msra.mxu0 %v1529
        %1725 = vmatprep.subr.bf16.mxu0 0
        %1726 = vmatpush1.bf16.msra.mxu0 %v1528
        %1727 = vmatprep.subr.bf16.mxu0 0
        %1728 = vmatpush1.bf16.msra.mxu0 %v1527
        %1729 = vmatprep.subr.bf16.mxu0 0
        %1730 = vmatpush2.bf16.msra.mxu0 0
        %1731 = vmatprep.subr.bf16.mxu0 0
        %1732 = vmatpush2.bf16.msra.mxu0 0
        %1733 = vmatprep.subr.bf16.mxu0 0
        %1734 = vmatpush2.bf16.msra.mxu0 0
        %1735 = vmatprep.subr.bf16.mxu0 0
        %1736 = vmatpush2.bf16.msra.mxu0 0
        %1737 = vmatprep.subr.bf16.mxu0 0
        %1738 = vmatpush2.bf16.msra.mxu0 0
        %1739 = vmatprep.subr.bf16.mxu0 0
        %1740 = vmatpush2.bf16.msra.mxu0 0
        %1741 = vmatprep.subr.bf16.mxu0 0
        %1742 = vmatpush2.bf16.msra.mxu0 0
        %1743 = vmatprep.subr.bf16.mxu0 0
        %1744 = vmatpush2.bf16.msra.mxu0 0
        %1745 = vmatprep.mubr.bf16.mxu0 0
        %1746 = vmatmul.mubr.bf16.gmra.mxu0 %v1483
        %v1747 = vpop.f32.mrf.mxu0
        %v1748 = vadd.f32 0.0, %v1747
        %v1749 = vpop.f32.mrf.mxu0
        %v1750 = vpop.f32.mrf.mxu0
        %v1751 = vadd.f32 0.0, %v1750
        %v1752 = vpop.f32.mrf.mxu0
        %1753 = vdwg.mxu0
        %v1754 = vmax.f32 %v1711, %v1748
        %v1755 = vmax.f32 %v1712, %v1751
        %1756 = vmatprep.subr.bf16.mxu0 0
        %1757 = vmatpush1.bf16.msra.mxu0 %v1534
        %1758 = vmatprep.subr.bf16.mxu0 0
        %1759 = vmatpush1.bf16.msra.mxu0 %v1533
        %1760 = vmatprep.subr.bf16.mxu0 0
        %1761 = vmatpush1.bf16.msra.mxu0 %v1532
        %1762 = vmatprep.subr.bf16.mxu0 0
        %1763 = vmatpush1.bf16.msra.mxu0 %v1531
        %1764 = vmatprep.subr.bf16.mxu0 0
        %1765 = vmatpush1.bf16.msra.mxu0 %v1530
        %1766 = vmatprep.subr.bf16.mxu0 0
        %1767 = vmatpush1.bf16.msra.mxu0 %v1529
        %1768 = vmatprep.subr.bf16.mxu0 0
        %1769 = vmatpush1.bf16.msra.mxu0 %v1528
        %1770 = vmatprep.subr.bf16.mxu0 0
        %1771 = vmatpush1.bf16.msra.mxu0 %v1527
        %1772 = vmatprep.subr.bf16.mxu0 0
        %1773 = vmatpush2.bf16.msra.mxu0 0
        %1774 = vmatprep.subr.bf16.mxu0 0
        %1775 = vmatpush2.bf16.msra.mxu0 0
        %1776 = vmatprep.subr.bf16.mxu0 0
        %1777 = vmatpush2.bf16.msra.mxu0 0
        %1778 = vmatprep.subr.bf16.mxu0 0
        %1779 = vmatpush2.bf16.msra.mxu0 0
        %1780 = vmatprep.subr.bf16.mxu0 0
        %1781 = vmatpush2.bf16.msra.mxu0 0
        %1782 = vmatprep.subr.bf16.mxu0 0
        %1783 = vmatpush2.bf16.msra.mxu0 0
        %1784 = vmatprep.subr.bf16.mxu0 0
        %1785 = vmatpush2.bf16.msra.mxu0 0
        %1786 = vmatprep.subr.bf16.mxu0 0
        %1787 = vmatpush2.bf16.msra.mxu0 0
        %1788 = vmatprep.mubr.bf16.mxu0 0
        %1789 = vmatmul.mubr.bf16.gmra.mxu0 %v1484
        %v1790 = vpop.f32.mrf.mxu0
        %v1791 = vadd.f32 0.0, %v1790
        %v1792 = vpop.f32.mrf.mxu0
        %v1793 = vpop.f32.mrf.mxu0
        %v1794 = vadd.f32 0.0, %v1793
        %v1795 = vpop.f32.mrf.mxu0
        %1796 = vdwg.mxu0
        %v1797 = vmax.f32 %v1754, %v1791
        %v1798 = vmax.f32 %v1755, %v1794
        %1799 = vmatprep.subr.bf16.mxu0 0
        %1800 = vmatpush1.bf16.msra.mxu0 %v1534
        %1801 = vmatprep.subr.bf16.mxu0 0
        %1802 = vmatpush1.bf16.msra.mxu0 %v1533
        %1803 = vmatprep.subr.bf16.mxu0 0
        %1804 = vmatpush1.bf16.msra.mxu0 %v1532
        %1805 = vmatprep.subr.bf16.mxu0 0
        %1806 = vmatpush1.bf16.msra.mxu0 %v1531
        %1807 = vmatprep.subr.bf16.mxu0 0
        %1808 = vmatpush1.bf16.msra.mxu0 %v1530
        %1809 = vmatprep.subr.bf16.mxu0 0
        %1810 = vmatpush1.bf16.msra.mxu0 %v1529
        %1811 = vmatprep.subr.bf16.mxu0 0
        %1812 = vmatpush1.bf16.msra.mxu0 %v1528
        %1813 = vmatprep.subr.bf16.mxu0 0
        %1814 = vmatpush1.bf16.msra.mxu0 %v1527
        %1815 = vmatprep.subr.bf16.mxu0 0
        %1816 = vmatpush2.bf16.msra.mxu0 0
        %1817 = vmatprep.subr.bf16.mxu0 0
        %1818 = vmatpush2.bf16.msra.mxu0 0
        %1819 = vmatprep.subr.bf16.mxu0 0
        %1820 = vmatpush2.bf16.msra.mxu0 0
        %1821 = vmatprep.subr.bf16.mxu0 0
        %1822 = vmatpush2.bf16.msra.mxu0 0
        %1823 = vmatprep.subr.bf16.mxu0 0
        %1824 = vmatpush2.bf16.msra.mxu0 0
        %1825 = vmatprep.subr.bf16.mxu0 0
        %1826 = vmatpush2.bf16.msra.mxu0 0
        %1827 = vmatprep.subr.bf16.mxu0 0
        %1828 = vmatpush2.bf16.msra.mxu0 0
        %1829 = vmatprep.subr.bf16.mxu0 0
        %1830 = vmatpush2.bf16.msra.mxu0 0
        %1831 = vmatprep.mubr.bf16.mxu0 0
        %1832 = vmatmul.mubr.bf16.gmra.mxu0 %v1485
        %v1833 = vpop.f32.mrf.mxu0
        %v1834 = vadd.f32 0.0, %v1833
        %v1835 = vpop.f32.mrf.mxu0
        %v1836 = vpop.f32.mrf.mxu0
        %v1837 = vadd.f32 0.0, %v1836
        %v1838 = vpop.f32.mrf.mxu0
        %1839 = vdwg.mxu0
        %v1840 = vmax.f32 %v1797, %v1834
        %v1841 = vmax.f32 %v1798, %v1837
        %1842 = vmatprep.subr.bf16.mxu0 0
        %1843 = vmatpush1.bf16.msra.mxu0 %v1534
        %1844 = vmatprep.subr.bf16.mxu0 0
        %1845 = vmatpush1.bf16.msra.mxu0 %v1533
        %1846 = vmatprep.subr.bf16.mxu0 0
        %1847 = vmatpush1.bf16.msra.mxu0 %v1532
        %1848 = vmatprep.subr.bf16.mxu0 0
        %1849 = vmatpush1.bf16.msra.mxu0 %v1531
        %1850 = vmatprep.subr.bf16.mxu0 0
        %1851 = vmatpush1.bf16.msra.mxu0 %v1530
        %1852 = vmatprep.subr.bf16.mxu0 0
        %1853 = vmatpush1.bf16.msra.mxu0 %v1529
        %1854 = vmatprep.subr.bf16.mxu0 0
        %1855 = vmatpush1.bf16.msra.mxu0 %v1528
        %1856 = vmatprep.subr.bf16.mxu0 0
        %1857 = vmatpush1.bf16.msra.mxu0 %v1527
        %1858 = vmatprep.subr.bf16.mxu0 0
        %1859 = vmatpush2.bf16.msra.mxu0 0
        %1860 = vmatprep.subr.bf16.mxu0 0
        %1861 = vmatpush2.bf16.msra.mxu0 0
        %1862 = vmatprep.subr.bf16.mxu0 0
        %1863 = vmatpush2.bf16.msra.mxu0 0
        %1864 = vmatprep.subr.bf16.mxu0 0
        %1865 = vmatpush2.bf16.msra.mxu0 0
        %1866 = vmatprep.subr.bf16.mxu0 0
        %1867 = vmatpush2.bf16.msra.mxu0 0
        %1868 = vmatprep.subr.bf16.mxu0 0
        %1869 = vmatpush2.bf16.msra.mxu0 0
        %1870 = vmatprep.subr.bf16.mxu0 0
        %1871 = vmatpush2.bf16.msra.mxu0 0
        %1872 = vmatprep.subr.bf16.mxu0 0
        %1873 = vmatpush2.bf16.msra.mxu0 0
        %1874 = vmatprep.mubr.bf16.mxu0 0
        %1875 = vmatmul.mubr.bf16.gmra.mxu0 %v1486
        %v1876 = vpop.f32.mrf.mxu0
        %v1877 = vadd.f32 0.0, %v1876
        %v1878 = vpop.f32.mrf.mxu0
        %v1879 = vpop.f32.mrf.mxu0
        %v1880 = vadd.f32 0.0, %v1879
        %v1881 = vpop.f32.mrf.mxu0
        %1882 = vdwg.mxu0
        %v1883 = vmax.f32 %v1840, %v1877
        %v1884 = vmax.f32 %v1841, %v1880
        %1885 = vmatprep.subr.bf16.mxu0 0
        %1886 = vmatpush1.bf16.msra.mxu0 %v1534
        %1887 = vmatprep.subr.bf16.mxu0 0
        %1888 = vmatpush1.bf16.msra.mxu0 %v1533
        %1889 = vmatprep.subr.bf16.mxu0 0
        %1890 = vmatpush1.bf16.msra.mxu0 %v1532
        %1891 = vmatprep.subr.bf16.mxu0 0
        %1892 = vmatpush1.bf16.msra.mxu0 %v1531
        %1893 = vmatprep.subr.bf16.mxu0 0
        %1894 = vmatpush1.bf16.msra.mxu0 %v1530
        %1895 = vmatprep.subr.bf16.mxu0 0
        %1896 = vmatpush1.bf16.msra.mxu0 %v1529
        %1897 = vmatprep.subr.bf16.mxu0 0
        %1898 = vmatpush1.bf16.msra.mxu0 %v1528
        %1899 = vmatprep.subr.bf16.mxu0 0
        %1900 = vmatpush1.bf16.msra.mxu0 %v1527
        %1901 = vmatprep.subr.bf16.mxu0 0
        %1902 = vmatpush2.bf16.msra.mxu0 0
        %1903 = vmatprep.subr.bf16.mxu0 0
        %1904 = vmatpush2.bf16.msra.mxu0 0
        %1905 = vmatprep.subr.bf16.mxu0 0
        %1906 = vmatpush2.bf16.msra.mxu0 0
        %1907 = vmatprep.subr.bf16.mxu0 0
        %1908 = vmatpush2.bf16.msra.mxu0 0
        %1909 = vmatprep.subr.bf16.mxu0 0
        %1910 = vmatpush2.bf16.msra.mxu0 0
        %1911 = vmatprep.subr.bf16.mxu0 0
        %1912 = vmatpush2.bf16.msra.mxu0 0
        %1913 = vmatprep.subr.bf16.mxu0 0
        %1914 = vmatpush2.bf16.msra.mxu0 0
        %1915 = vmatprep.subr.bf16.mxu0 0
        %1916 = vmatpush2.bf16.msra.mxu0 0
        %1917 = vmatprep.mubr.bf16.mxu0 0
        %1918 = vmatmul.mubr.bf16.gmra.mxu0 %v1487
        %v1919 = vpop.f32.mrf.mxu0
        %v1920 = vadd.f32 0.0, %v1919
        %v1921 = vpop.f32.mrf.mxu0
        %v1922 = vpop.f32.mrf.mxu0
        %v1923 = vadd.f32 0.0, %v1922
        %v1924 = vpop.f32.mrf.mxu0
        %1925 = vdwg.mxu0
        %v1926 = vmax.f32 %v1883, %v1920
        %v1927 = vmax.f32 %v1884, %v1923
        %1928 = vmatprep.subr.bf16.mxu0 0
        %1929 = vmatpush1.bf16.msra.mxu0 %v1534
        %1930 = vmatprep.subr.bf16.mxu0 0
        %1931 = vmatpush1.bf16.msra.mxu0 %v1533
        %1932 = vmatprep.subr.bf16.mxu0 0
        %1933 = vmatpush1.bf16.msra.mxu0 %v1532
        %1934 = vmatprep.subr.bf16.mxu0 0
        %1935 = vmatpush1.bf16.msra.mxu0 %v1531
        %1936 = vmatprep.subr.bf16.mxu0 0
        %1937 = vmatpush1.bf16.msra.mxu0 %v1530
        %1938 = vmatprep.subr.bf16.mxu0 0
        %1939 = vmatpush1.bf16.msra.mxu0 %v1529
        %1940 = vmatprep.subr.bf16.mxu0 0
        %1941 = vmatpush1.bf16.msra.mxu0 %v1528
        %1942 = vmatprep.subr.bf16.mxu0 0
        %1943 = vmatpush1.bf16.msra.mxu0 %v1527
        %1944 = vmatprep.subr.bf16.mxu0 0
        %1945 = vmatpush2.bf16.msra.mxu0 0
        %1946 = vmatprep.subr.bf16.mxu0 0
        %1947 = vmatpush2.bf16.msra.mxu0 0
        %1948 = vmatprep.subr.bf16.mxu0 0
        %1949 = vmatpush2.bf16.msra.mxu0 0
        %1950 = vmatprep.subr.bf16.mxu0 0
        %1951 = vmatpush2.bf16.msra.mxu0 0
        %1952 = vmatprep.subr.bf16.mxu0 0
        %1953 = vmatpush2.bf16.msra.mxu0 0
        %1954 = vmatprep.subr.bf16.mxu0 0
        %1955 = vmatpush2.bf16.msra.mxu0 0
        %1956 = vmatprep.subr.bf16.mxu0 0
        %1957 = vmatpush2.bf16.msra.mxu0 0
        %1958 = vmatprep.subr.bf16.mxu0 0
        %1959 = vmatpush2.bf16.msra.mxu0 0
        %1960 = vmatprep.mubr.bf16.mxu0 0
        %1961 = vmatmul.mubr.bf16.gmra.mxu0 %v1488
        %v1962 = vpop.f32.mrf.mxu0
        %v1963 = vadd.f32 0.0, %v1962
        %v1964 = vpop.f32.mrf.mxu0
        %v1965 = vpop.f32.mrf.mxu0
        %v1966 = vadd.f32 0.0, %v1965
        %v1967 = vpop.f32.mrf.mxu0
        %1968 = vdwg.mxu0
        %v1969 = vmax.f32 %v1926, %v1963
        %v1970 = vmax.f32 %v1927, %v1966
        %1971 = vmatprep.subr.bf16.mxu0 0
        %1972 = vmatpush1.bf16.msra.mxu0 %v1534
        %1973 = vmatprep.subr.bf16.mxu0 0
        %1974 = vmatpush1.bf16.msra.mxu0 %v1533
        %1975 = vmatprep.subr.bf16.mxu0 0
        %1976 = vmatpush1.bf16.msra.mxu0 %v1532
        %1977 = vmatprep.subr.bf16.mxu0 0
        %1978 = vmatpush1.bf16.msra.mxu0 %v1531
        %1979 = vmatprep.subr.bf16.mxu0 0
        %1980 = vmatpush1.bf16.msra.mxu0 %v1530
        %1981 = vmatprep.subr.bf16.mxu0 0
        %1982 = vmatpush1.bf16.msra.mxu0 %v1529
        %1983 = vmatprep.subr.bf16.mxu0 0
        %1984 = vmatpush1.bf16.msra.mxu0 %v1528
        %1985 = vmatprep.subr.bf16.mxu0 0
        %1986 = vmatpush1.bf16.msra.mxu0 %v1527
        %1987 = vmatprep.subr.bf16.mxu0 0
        %1988 = vmatpush2.bf16.msra.mxu0 0
        %1989 = vmatprep.subr.bf16.mxu0 0
        %1990 = vmatpush2.bf16.msra.mxu0 0
        %1991 = vmatprep.subr.bf16.mxu0 0
        %1992 = vmatpush2.bf16.msra.mxu0 0
        %1993 = vmatprep.subr.bf16.mxu0 0
        %1994 = vmatpush2.bf16.msra.mxu0 0
        %1995 = vmatprep.subr.bf16.mxu0 0
        %1996 = vmatpush2.bf16.msra.mxu0 0
        %1997 = vmatprep.subr.bf16.mxu0 0
        %1998 = vmatpush2.bf16.msra.mxu0 0
        %1999 = vmatprep.subr.bf16.mxu0 0
        %2000 = vmatpush2.bf16.msra.mxu0 0
        %2001 = vmatprep.subr.bf16.mxu0 0
        %2002 = vmatpush2.bf16.msra.mxu0 0
        %2003 = vmatprep.mubr.bf16.mxu0 0
        %2004 = vmatmul.mubr.bf16.gmra.mxu0 %v1489
        %v2005 = vpop.f32.mrf.mxu0
        %v2006 = vadd.f32 0.0, %v2005
        %v2007 = vpop.f32.mrf.mxu0
        %v2008 = vpop.f32.mrf.mxu0
        %v2009 = vadd.f32 0.0, %v2008
        %v2010 = vpop.f32.mrf.mxu0
        %2011 = vdwg.mxu0
        %v2012 = vmax.f32 %v1969, %v2006
        %v2013 = vmax.f32 %v1970, %v2009
        %2014 = vmatprep.subr.bf16.mxu0 0
        %2015 = vmatpush1.bf16.msra.mxu0 %v1534
        %2016 = vmatprep.subr.bf16.mxu0 0
        %2017 = vmatpush1.bf16.msra.mxu0 %v1533
        %2018 = vmatprep.subr.bf16.mxu0 0
        %2019 = vmatpush1.bf16.msra.mxu0 %v1532
        %2020 = vmatprep.subr.bf16.mxu0 0
        %2021 = vmatpush1.bf16.msra.mxu0 %v1531
        %2022 = vmatprep.subr.bf16.mxu0 0
        %2023 = vmatpush1.bf16.msra.mxu0 %v1530
        %2024 = vmatprep.subr.bf16.mxu0 0
        %2025 = vmatpush1.bf16.msra.mxu0 %v1529
        %2026 = vmatprep.subr.bf16.mxu0 0
        %2027 = vmatpush1.bf16.msra.mxu0 %v1528
        %2028 = vmatprep.subr.bf16.mxu0 0
        %2029 = vmatpush1.bf16.msra.mxu0 %v1527
        %2030 = vmatprep.subr.bf16.mxu0 0
        %2031 = vmatpush2.bf16.msra.mxu0 0
        %2032 = vmatprep.subr.bf16.mxu0 0
        %2033 = vmatpush2.bf16.msra.mxu0 0
        %2034 = vmatprep.subr.bf16.mxu0 0
        %2035 = vmatpush2.bf16.msra.mxu0 0
        %2036 = vmatprep.subr.bf16.mxu0 0
        %2037 = vmatpush2.bf16.msra.mxu0 0
        %2038 = vmatprep.subr.bf16.mxu0 0
        %2039 = vmatpush2.bf16.msra.mxu0 0
        %2040 = vmatprep.subr.bf16.mxu0 0
        %2041 = vmatpush2.bf16.msra.mxu0 0
        %2042 = vmatprep.subr.bf16.mxu0 0
        %2043 = vmatpush2.bf16.msra.mxu0 0
        %2044 = vmatprep.subr.bf16.mxu0 0
        %2045 = vmatpush2.bf16.msra.mxu0 0
        %2046 = vmatprep.mubr.bf16.mxu0 0
        %2047 = vmatmul.mubr.bf16.gmra.mxu0 %v1490
        %v2048 = vpop.f32.mrf.mxu0
        %v2049 = vadd.f32 0.0, %v2048
        %v2050 = vpop.f32.mrf.mxu0
        %v2051 = vpop.f32.mrf.mxu0
        %v2052 = vadd.f32 0.0, %v2051
        %v2053 = vpop.f32.mrf.mxu0
        %2054 = vdwg.mxu0
        %v2055 = vmax.f32 %v2012, %v2049
        %v2056 = vmax.f32 %v2013, %v2052
        %2057 = vmatprep.subr.bf16.mxu0 0
        %2058 = vmatpush1.bf16.msra.mxu0 %v1534
        %2059 = vmatprep.subr.bf16.mxu0 0
        %2060 = vmatpush1.bf16.msra.mxu0 %v1533
        %2061 = vmatprep.subr.bf16.mxu0 0
        %2062 = vmatpush1.bf16.msra.mxu0 %v1532
        %2063 = vmatprep.subr.bf16.mxu0 0
        %2064 = vmatpush1.bf16.msra.mxu0 %v1531
        %2065 = vmatprep.subr.bf16.mxu0 0
        %2066 = vmatpush1.bf16.msra.mxu0 %v1530
        %2067 = vmatprep.subr.bf16.mxu0 0
        %2068 = vmatpush1.bf16.msra.mxu0 %v1529
        %2069 = vmatprep.subr.bf16.mxu0 0
        %2070 = vmatpush1.bf16.msra.mxu0 %v1528
        %2071 = vmatprep.subr.bf16.mxu0 0
        %2072 = vmatpush1.bf16.msra.mxu0 %v1527
        %2073 = vmatprep.subr.bf16.mxu0 0
        %2074 = vmatpush2.bf16.msra.mxu0 0
        %2075 = vmatprep.subr.bf16.mxu0 0
        %2076 = vmatpush2.bf16.msra.mxu0 0
        %2077 = vmatprep.subr.bf16.mxu0 0
        %2078 = vmatpush2.bf16.msra.mxu0 0
        %2079 = vmatprep.subr.bf16.mxu0 0
        %2080 = vmatpush2.bf16.msra.mxu0 0
        %2081 = vmatprep.subr.bf16.mxu0 0
        %2082 = vmatpush2.bf16.msra.mxu0 0
        %2083 = vmatprep.subr.bf16.mxu0 0
        %2084 = vmatpush2.bf16.msra.mxu0 0
        %2085 = vmatprep.subr.bf16.mxu0 0
        %2086 = vmatpush2.bf16.msra.mxu0 0
        %2087 = vmatprep.subr.bf16.mxu0 0
        %2088 = vmatpush2.bf16.msra.mxu0 0
        %2089 = vmatprep.mubr.bf16.mxu0 0
        %2090 = vmatmul.mubr.bf16.gmra.mxu0 %v1491
        %v2091 = vpop.f32.mrf.mxu0
        %v2092 = vadd.f32 0.0, %v2091
        %v2093 = vpop.f32.mrf.mxu0
        %v2094 = vpop.f32.mrf.mxu0
        %v2095 = vadd.f32 0.0, %v2094
        %v2096 = vpop.f32.mrf.mxu0
        %2097 = vdwg.mxu0
        %v2098 = vmax.f32 %v2055, %v2092
        %v2099 = vmax.f32 %v2056, %v2095
        %2100 = vmatprep.subr.bf16.mxu0 0
        %2101 = vmatpush1.bf16.msra.mxu0 %v1534
        %2102 = vmatprep.subr.bf16.mxu0 0
        %2103 = vmatpush1.bf16.msra.mxu0 %v1533
        %2104 = vmatprep.subr.bf16.mxu0 0
        %2105 = vmatpush1.bf16.msra.mxu0 %v1532
        %2106 = vmatprep.subr.bf16.mxu0 0
        %2107 = vmatpush1.bf16.msra.mxu0 %v1531
        %2108 = vmatprep.subr.bf16.mxu0 0
        %2109 = vmatpush1.bf16.msra.mxu0 %v1530
        %2110 = vmatprep.subr.bf16.mxu0 0
        %2111 = vmatpush1.bf16.msra.mxu0 %v1529
        %2112 = vmatprep.subr.bf16.mxu0 0
        %2113 = vmatpush1.bf16.msra.mxu0 %v1528
        %2114 = vmatprep.subr.bf16.mxu0 0
        %2115 = vmatpush1.bf16.msra.mxu0 %v1527
        %2116 = vmatprep.subr.bf16.mxu0 0
        %2117 = vmatpush2.bf16.msra.mxu0 0
        %2118 = vmatprep.subr.bf16.mxu0 0
        %2119 = vmatpush2.bf16.msra.mxu0 0
        %2120 = vmatprep.subr.bf16.mxu0 0
        %2121 = vmatpush2.bf16.msra.mxu0 0
        %2122 = vmatprep.subr.bf16.mxu0 0
        %2123 = vmatpush2.bf16.msra.mxu0 0
        %2124 = vmatprep.subr.bf16.mxu0 0
        %2125 = vmatpush2.bf16.msra.mxu0 0
        %2126 = vmatprep.subr.bf16.mxu0 0
        %2127 = vmatpush2.bf16.msra.mxu0 0
        %2128 = vmatprep.subr.bf16.mxu0 0
        %2129 = vmatpush2.bf16.msra.mxu0 0
        %2130 = vmatprep.subr.bf16.mxu0 0
        %2131 = vmatpush2.bf16.msra.mxu0 0
        %2132 = vmatprep.mubr.bf16.mxu0 0
        %2133 = vmatmul.mubr.bf16.gmra.mxu0 %v1492
        %v2134 = vpop.f32.mrf.mxu0
        %v2135 = vadd.f32 0.0, %v2134
        %v2136 = vpop.f32.mrf.mxu0
        %v2137 = vpop.f32.mrf.mxu0
        %v2138 = vadd.f32 0.0, %v2137
        %v2139 = vpop.f32.mrf.mxu0
        %2140 = vdwg.mxu0
        %v2141 = vmax.f32 %v2098, %v2135
        %v2142 = vmax.f32 %v2099, %v2138
        %2143 = vmatprep.subr.bf16.mxu0 0
        %2144 = vmatpush1.bf16.msra.mxu0 %v1534
        %2145 = vmatprep.subr.bf16.mxu0 0
        %2146 = vmatpush1.bf16.msra.mxu0 %v1533
        %2147 = vmatprep.subr.bf16.mxu0 0
        %2148 = vmatpush1.bf16.msra.mxu0 %v1532
        %2149 = vmatprep.subr.bf16.mxu0 0
        %2150 = vmatpush1.bf16.msra.mxu0 %v1531
        %2151 = vmatprep.subr.bf16.mxu0 0
        %2152 = vmatpush1.bf16.msra.mxu0 %v1530
        %2153 = vmatprep.subr.bf16.mxu0 0
        %2154 = vmatpush1.bf16.msra.mxu0 %v1529
        %2155 = vmatprep.subr.bf16.mxu0 0
        %2156 = vmatpush1.bf16.msra.mxu0 %v1528
        %2157 = vmatprep.subr.bf16.mxu0 0
        %2158 = vmatpush1.bf16.msra.mxu0 %v1527
        %2159 = vmatprep.subr.bf16.mxu0 0
        %2160 = vmatpush2.bf16.msra.mxu0 0
        %2161 = vmatprep.subr.bf16.mxu0 0
        %2162 = vmatpush2.bf16.msra.mxu0 0
        %2163 = vmatprep.subr.bf16.mxu0 0
        %2164 = vmatpush2.bf16.msra.mxu0 0
        %2165 = vmatprep.subr.bf16.mxu0 0
        %2166 = vmatpush2.bf16.msra.mxu0 0
        %2167 = vmatprep.subr.bf16.mxu0 0
        %2168 = vmatpush2.bf16.msra.mxu0 0
        %2169 = vmatprep.subr.bf16.mxu0 0
        %2170 = vmatpush2.bf16.msra.mxu0 0
        %2171 = vmatprep.subr.bf16.mxu0 0
        %2172 = vmatpush2.bf16.msra.mxu0 0
        %2173 = vmatprep.subr.bf16.mxu0 0
        %2174 = vmatpush2.bf16.msra.mxu0 0
        %2175 = vmatprep.mubr.bf16.mxu0 0
        %2176 = vmatmul.mubr.bf16.gmra.mxu0 %v1493
        %v2177 = vpop.f32.mrf.mxu0
        %v2178 = vadd.f32 0.0, %v2177
        %v2179 = vpop.f32.mrf.mxu0
        %v2180 = vpop.f32.mrf.mxu0
        %v2181 = vadd.f32 0.0, %v2180
        %v2182 = vpop.f32.mrf.mxu0
        %2183 = vdwg.mxu0
        %v2184 = vmax.f32 %v2141, %v2178
        %v2185 = vmax.f32 %v2142, %v2181
        %2186 = vmatprep.subr.bf16.mxu0 0
        %2187 = vmatpush1.bf16.msra.mxu0 %v1534
        %2188 = vmatprep.subr.bf16.mxu0 0
        %2189 = vmatpush1.bf16.msra.mxu0 %v1533
        %2190 = vmatprep.subr.bf16.mxu0 0
        %2191 = vmatpush1.bf16.msra.mxu0 %v1532
        %2192 = vmatprep.subr.bf16.mxu0 0
        %2193 = vmatpush1.bf16.msra.mxu0 %v1531
        %2194 = vmatprep.subr.bf16.mxu0 0
        %2195 = vmatpush1.bf16.msra.mxu0 %v1530
        %2196 = vmatprep.subr.bf16.mxu0 0
        %2197 = vmatpush1.bf16.msra.mxu0 %v1529
        %2198 = vmatprep.subr.bf16.mxu0 0
        %2199 = vmatpush1.bf16.msra.mxu0 %v1528
        %2200 = vmatprep.subr.bf16.mxu0 0
        %2201 = vmatpush1.bf16.msra.mxu0 %v1527
        %2202 = vmatprep.subr.bf16.mxu0 0
        %2203 = vmatpush2.bf16.msra.mxu0 0
        %2204 = vmatprep.subr.bf16.mxu0 0
        %2205 = vmatpush2.bf16.msra.mxu0 0
        %2206 = vmatprep.subr.bf16.mxu0 0
        %2207 = vmatpush2.bf16.msra.mxu0 0
        %2208 = vmatprep.subr.bf16.mxu0 0
        %2209 = vmatpush2.bf16.msra.mxu0 0
        %2210 = vmatprep.subr.bf16.mxu0 0
        %2211 = vmatpush2.bf16.msra.mxu0 0
        %2212 = vmatprep.subr.bf16.mxu0 0
        %2213 = vmatpush2.bf16.msra.mxu0 0
        %2214 = vmatprep.subr.bf16.mxu0 0
        %2215 = vmatpush2.bf16.msra.mxu0 0
        %2216 = vmatprep.subr.bf16.mxu0 0
        %2217 = vmatpush2.bf16.msra.mxu0 0
        %2218 = vmatprep.mubr.bf16.mxu0 0
        %2219 = vmatmul.mubr.bf16.gmra.mxu0 %v1494
        %v2220 = vpop.f32.mrf.mxu0
        %v2221 = vadd.f32 0.0, %v2220
        %v2222 = vpop.f32.mrf.mxu0
        %v2223 = vpop.f32.mrf.mxu0
        %v2224 = vadd.f32 0.0, %v2223
        %v2225 = vpop.f32.mrf.mxu0
        %2226 = vdwg.mxu0
        %v2227 = vmax.f32 %v2184, %v2221
        %v2228 = vmax.f32 %v2185, %v2224
        %v2229 = vld [vmem:[%s4] sm:$0x1]
        %v2231 = vlaneseq
        %v2232 = vshrl.u32 %v2231, 7
        %v2233 = vsub.s32 0, %v2232
        %v2234 = vrot.slane %v2229, %v2233
        %v2236 = vadd.f32 %v2227, %v2234
        %v2237 = vadd.f32 %v2228, %v2234
        %v2238 = vmax.f32 %v2236, 0.0
        %v2239 = vmax.f32 %v2237, 0.0
        %2240 = vst [vmem:[%s218] sm:$0xff] %v2238
        %2241 = vst [vmem:[%s218 + $0x8] sm:$0xff] %v2239
        %s2242 = sand.u32 %s137, 1
        %s2243 = scalar_lea.sflag [#allocation3], %s2242
        %s2244 = sand.u32 %s137, 1
        %s2245 = smul.addr %s2244, 16
        %s2246 = scalar_lea.vmem [#allocation2], %s2245
        // Predicated region
        $region41: #{_lambda_.1} parent=39 // pred_check
          %p2247 = pneg %p147
        $region42: #{_lambda_.1} parent=39 // pred_check_branch
          %2249 = sbr.rel (%p2247) target = $region44
        $region43: #{_lambda_.1} parent=39 // pred_region
          %s2250 = smul.u32 2, %s19
          %s2252 = ssub.s32 256, 256
          %2253 = vsyncadd %s2243, %s2252
          %s2254 = smul.addr %s2250, 128
          %s2255 = scalar_lea.hbm %s5, %s2254
          %s2256 = sshll.u32 %s2246, 4
          %s2257 = int_to_ptr.vmem [resolvable:$true] %s2256
          %2262 = dma.vmem_to_hbm [thread:$0]  %s2257, 256, %s2255, %s2243, 128, 128, 8
        $region44: #{_lambda_.1} parent=39 // pred_fallthru
          _
      $region40: #{_lambda_.1} parent=5 // pred_fallthru
        _
      %p2263 = scmp.le.s32.totalorder 2, %s14
      // Predicated region
      $region45: #{_lambda_.1} parent=5 // pred_check
        %p2264 = pneg %p2263
      $region46: #{_lambda_.1} parent=5 // pred_check_branch
        %2266 = sbr.rel (%p2264) target = $region48
      $region47: #{_lambda_.1} parent=5 // pred_region
        %s2267 = ssub.s32 %s14, 2
        // Predicated region
        $region49: #{_lambda_.1} parent=47 // pred_check
          %p2268 = pneg %p153
        $region50: #{_lambda_.1} parent=47 // pred_check_branch
          %2270 = sbr.rel (%p2268) target = $region52
        $region51: #{_lambda_.1} parent=47 // pred_region
          %s2271 = sand.u32 %s138, 1
          %s2272 = scalar_lea.sflag [#allocation3], %s2271
          %s2273 = sand.u32 %s138, 1
          %s2274 = smul.addr %s2273, 16
          %s2275 = scalar_lea.vmem [#allocation2], %s2274
          %2276 = dma.done %s2272, 256
        $region52: #{_lambda_.1} parent=47 // pred_fallthru
          _
      $region48: #{_lambda_.1} parent=5 // pred_fallthru
        _
    $region6: #{_lambda_.1} parent=1 // loop_footer
      %s18 = sadd.s32 1, %s14
    $region7: #{_lambda_.1} parent=1 // loop_footer_branch
      %13 = sbr.rel target = $region3
    $region8: #{_lambda_.1} parent=1 // loop_exit
      _
    %2277 = vsyncpa [#allocation3], 1
    %s2278 = scalar_lea.sflag [#allocation3], 1
    %2279 = vsyncpa %s2278, 1

</llo_original>
